<compile_context>
chip_gen: v7x
topology: tpu7x:2x2x1
jax: 0.10.0
libtpu: 0.0.40
codegen_flags: <defaults>
</compile_context>

<pallas_src>
import jax
import jax.numpy as jnp
from jax.experimental import pallas as pl
from jax.experimental.pallas import tpu as pltpu


BN_EPS = 1e-5  # PyTorch BatchNorm1d default


# ---------------------------------------------------------------------------
# Fused kernel: 3-NN interpolation + folded MLP, channels-first, one N-tile.
# ---------------------------------------------------------------------------
def _make_fused_kernel(n_layers, n_neighbors, has_p1, compute_dtype):
    def kernel(*refs):
        out_ref = refs[-1]
        i = 0
        x1 = refs[i][0].astype(jnp.float32); i += 1      # (3, TN)  f32 coords
        x2 = refs[i][0].astype(jnp.float32); i += 1      # (3, S)   f32 coords
        p2 = refs[i][0]; i += 1                          # (D2, S)  compute_dtype
        p1 = None
        if has_p1:
            p1 = refs[i][0]; i += 1                      # (D1, TN) compute_dtype
        wb = refs[i:-1]                                  # folded weights / biases

        tn = x1.shape[1]
        s = x2.shape[1]

        # ---- squared pairwise distances (row term deferred: argmin-invariant) ----
        # Canonical (non-transposed-LHS) dot_general keeps Mosaic's MXU lowering on
        # the known-good path; the (TN,3) operand it needs is tiny per tile.
        x1_t = x1.T                                                   # (TN, 3)
        sq1 = jnp.sum(x1_t * x1_t, axis=-1, keepdims=True)            # (TN, 1)
        sq2 = jnp.sum(x2 * x2, axis=0)                                # (S,)
        cross = jax.lax.dot_general(
            x1_t, x2, (((1,), (0,)), ((), ())),
            preferred_element_type=jnp.float32)                       # (TN, S)
        d = sq2[None, :] - 2.0 * cross                                # (TN, S)

        # ---- 3 passes of exact first-occurrence argmin; accumulate a weighted
        # selection matrix, then ONE bf16 matmul with points2 afterwards.
        # (A fused value+index reduction would halve the XLU reductions, but its
        #  Mosaic lowering is not guaranteed; the two-pass form is kept for safety.)
        iota = jax.lax.broadcasted_iota(jnp.int32, (tn, s), 1)
        sel_w = jnp.zeros((tn, s), jnp.float32)
        norm = jnp.zeros((tn, 1), jnp.float32)
        dcur = d
        for _ in range(n_neighbors):
            dmin = jnp.min(dcur, axis=-1, keepdims=True)              # (TN, 1)
            idx = jnp.min(jnp.where(dcur == dmin, iota, s),
                          axis=-1, keepdims=True)                     # stable tie-break
            sel = iota == idx                                         # (TN, S) one-hot
            # clamp tiny negative rounding artifacts of the -2ab+a^2+b^2 formula
            dist = jnp.maximum(dmin + sq1, 0.0)
            w = 1.0 / (dist + 1e-8)                                   # (TN, 1)
            sel_w = sel_w + jnp.where(sel, w, 0.0)                    # single VPU select
            norm = norm + w
            dcur = jnp.where(sel, jnp.inf, dcur)
        sel_w = sel_w * (1.0 / norm)                                  # normalize weights
        interp = jax.lax.dot_general(                                 # (D2, TN), f32 acc
            p2, sel_w.astype(compute_dtype), (((1,), (1,)), ((), ())),
            preferred_element_type=jnp.float32)
        interp_c = interp.astype(compute_dtype)

        # ---- fused MLP: y = relu(W_l @ y + b_l), channels-first (N on lanes) ----
        j = 0
        if has_p1:
            w0a = wb[j][...]; j += 1                                  # (C0, D1)
            w0b = wb[j][...]; j += 1                                  # (C0, D2)
            b0 = wb[j][...]; j += 1                                   # (C0, 1)
            y = (jnp.dot(w0a, p1, preferred_element_type=jnp.float32)
                 + jnp.dot(w0b, interp_c, preferred_element_type=jnp.float32))
        else:
            w0 = wb[j][...]; j += 1
            b0 = wb[j][...]; j += 1
            y = jnp.dot(w0, interp_c, preferred_element_type=jnp.float32)
        y = jnp.maximum(y + b0, 0.0)
        for _ in range(1, n_layers):
            w = wb[j][...]; j += 1
            b = wb[j][...]; j += 1
            y = jnp.dot(w, y.astype(compute_dtype),
                        preferred_element_type=jnp.float32)
            y = jnp.maximum(y + b, 0.0)

        out_ref[0] = y.astype(out_ref.dtype)

    return kernel


# ---------------------------------------------------------------------------
# Tile / VMEM planning (explicit byte accounting across v5e / v6e / v7x)
# ---------------------------------------------------------------------------
def _plan_tiles(n, s, batch, d1, d2, channels, compute_itemsize, out_itemsize):
    """Return (tile_n, padded_n, vmem_limit_bytes)."""
    try:
        cap = pltpu.get_tpu_info().vmem_capacity_bytes
    except Exception:
        cap = 64 * 1024 * 1024   # v7x per-TC capacity: the most conservative default
    # Raise the scoped limit above the 16/32 MiB defaults, leaving headroom for
    # compiler temporaries and (on megacore parts) duplicated resident blocks.
    vmem_limit = int(min(cap * 3 // 4, 96 * 1024 * 1024))
    budget = min(vmem_limit // 2, 32 * 1024 * 1024)

    c_max = max(channels)
    c_last = channels[-1]

    # Resident (constant along the N axis) bytes: xyz2 f32, points2 + folded
    # weights in compute dtype, f32 biases.
    resident = 3 * s * 4 + d2 * s * compute_itemsize
    prev = d1 + d2
    for c in channels:
        resident += c * prev * compute_itemsize + c * 4
        prev = c

    # Per-point bytes: ~6 live (TN,S) temporaries in the NN loop (d, sel_w,
    # select/where temps f32 + int32 iota), double-buffered xyz1/points1/out IO
    # blocks, the f32 interp tile and ~2 live (C,TN) f32 MLP intermediates.
    per_n = (6 * s * 4
             + 2 * 3 * 4
             + 2 * d1 * compute_itemsize
             + 2 * c_last * out_itemsize
             + d2 * 4
             + 2 * c_max * 4)

    if n <= 256 and resident + n * per_n <= budget:
        return n, n, vmem_limit          # single full-extent tile, no padding needed

    tn = (budget - resident) // per_n
    tn = max(128, min(2048, (tn // 128) * 128))
    tn = min(tn, pl.cdiv(n, 128) * 128)  # never wider than (128-padded) N
    n_pad = pl.cdiv(n, tn) * tn
    # v7x megacore: keep >= 2 parallel grid steps when B == 1 so both TCs get work.
    if batch == 1 and n_pad // tn < 2 and tn > 128:
        tn = max(128, (tn // 2) // 128 * 128)
        n_pad = pl.cdiv(n, tn) * tn
    return tn, n_pad, vmem_limit


# ---------------------------------------------------------------------------
# Parameters (deterministic init) and BN folding
# ---------------------------------------------------------------------------
def init_fea_propagate(key, in_channel, mlp):
    params = []
    last = in_channel
    for out_c in mlp:
        key, k1, k2, k3, k4, k5, k6 = jax.random.split(key, 7)
        params.append(dict(
            w=0.1 * jax.random.normal(k1, (out_c, last), jnp.float32),  # Conv1d (out,in,1) squeezed
            b=0.1 * jax.random.normal(k2, (out_c,), jnp.float32),
            gamma=1.0 + 0.1 * jax.random.normal(k3, (out_c,), jnp.float32),
            beta=0.1 * jax.random.normal(k4, (out_c,), jnp.float32),
            mean=0.1 * jax.random.normal(k5, (out_c,), jnp.float32),
            var=jax.nn.softplus(jax.random.normal(k6, (out_c,), jnp.float32)) + 0.5,
        ))
        last = out_c
    return params


def _fold_bn(p):
    # TODO(synk): BatchNorm is reproduced in eval mode (running stats); training-mode
    # batch statistics would need a cross-(B,N) reduction per layer.
    scale = p["gamma"] / jnp.sqrt(p["var"] + BN_EPS)
    w_fold = p["w"] * scale[:, None]                    # (Cout, Cin)
    b_fold = (p["b"] - p["mean"]) * scale + p["beta"]   # (Cout,)
    return w_fold, b_fold


# ---------------------------------------------------------------------------
# Forward
# ---------------------------------------------------------------------------
def fea_propagate_forward(params, xyz1, xyz2, points1, points2,
                          *, compute_dtype=jnp.bfloat16, out_dtype=jnp.float32):
    """Inputs in PyTorch layout: xyz1 (B,3,N), xyz2 (B,3,S), points1 (B,D1,N) or None,
    points2 (B,D2,S). Returns (B, mlp[-1], N).  Pass out_dtype=compute_dtype to
    halve the HBM writeback when the consumer accepts bf16."""
    xyz1 = xyz1.astype(jnp.float32)            # coords stay f32: exact NN selection
    xyz2 = xyz2.astype(jnp.float32)
    points2 = points2.astype(compute_dtype)    # bf16 stream: half the DMA bytes

    B, _, N = xyz1.shape
    S = xyz2.shape[2]
    D2 = points2.shape[1]
    has_p1 = points1 is not None
    D1 = points1.shape[1] if has_p1 else 0

    n_layers = len(params)
    channels = [p["w"].shape[0] for p in params]
    c_last = channels[-1]
    # With S == 1 the single-neighbour weight normalizes to exactly 1, which equals
    # the PyTorch "repeat points2" branch, so no special case is needed.
    n_neighbors = min(3, S)

    tn, n_pad, vmem_limit = _plan_tiles(
        N, S, B, D1, D2, channels,
        jnp.dtype(compute_dtype).itemsize, jnp.dtype(out_dtype).itemsize)

    if n_pad != N:
        xyz1 = jnp.pad(xyz1, ((0, 0), (0, 0), (0, n_pad - N)))
        if has_p1:
            points1 = jnp.pad(points1, ((0, 0), (0, 0), (0, n_pad - N)))
    if has_p1:
        points1 = points1.astype(compute_dtype)

    grid = (B, n_pad // tn)

    # Arrays (order must match the kernel's ref order).
    in_arrays = [xyz1, xyz2, points2]
    if has_p1:
        in_arrays.append(points1)
    folded = []
    for li, p in enumerate(params):
        w_f, b_f = _fold_bn(p)
        b_f = b_f.reshape(-1, 1).astype(jnp.float32)
        if li == 0 and has_p1:
            # split layer-0 weight -> concat([points1, interp]) never materializes
            group = (w_f[:, :D1].astype(compute_dtype),
                     w_f[:, D1:].astype(compute_dtype), b_f)
        else:
            group = (w_f.astype(compute_dtype), b_f)
        folded.append(group)
        in_arrays += list(group)

    kernel = _make_fused_kernel(n_layers, n_neighbors, has_p1, compute_dtype)

    def run(single_buffer_consts):
        def const_spec(shape, index_map):
            # Blocks whose index map is constant along the N axis never need the
            # default double buffer; Buffered(1) halves their VMEM footprint.
            if single_buffer_consts:
                return pl.BlockSpec(shape, index_map, pipeline_mode=pl.Buffered(1))
            return pl.BlockSpec(shape, index_map)

        in_specs = [
            pl.BlockSpec((1, 3, tn), lambda b, n: (b, 0, n)),
            const_spec((1, 3, S), lambda b, n: (b, 0, 0)),
            const_spec((1, D2, S), lambda b, n: (b, 0, 0)),
        ]
        if has_p1:
            in_specs.append(pl.BlockSpec((1, D1, tn), lambda b, n: (b, 0, n)))
        for group in folded:
            for arr in group:
                in_specs.append(const_spec(arr.shape, lambda b, n: (0, 0)))

        return pl.pallas_call(
            kernel,
            out_shape=jax.ShapeDtypeStruct((B, c_last, n_pad), out_dtype),
            grid_spec=pltpu.PrefetchScalarGridSpec(
                num_scalar_prefetch=0,
                grid=grid,
                in_specs=in_specs,
                out_specs=pl.BlockSpec((1, c_last, tn), lambda b, n: (b, 0, n)),
            ),
            compiler_params=pltpu.CompilerParams(
                dimension_semantics=("parallel", "parallel"),
                vmem_limit_bytes=vmem_limit),
        )(*in_arrays)

    try:
        out = run(True)
    except Exception:
        # Fallback if this jax build rejects BlockSpec pipeline_mode=Buffered(1):
        # default double-buffered constant blocks (identical results, more VMEM).
        out = run(False)

    return out[:, :, :N] if n_pad != N else out


# ---------------------------------------------------------------------------
# Pure-JAX reference (mirrors the PyTorch forward, BN in eval mode)
# ---------------------------------------------------------------------------
def reference_forward(params, xyz1, xyz2, points1, points2):
    x1 = jnp.transpose(xyz1, (0, 2, 1))
    x2 = jnp.transpose(xyz2, (0, 2, 1))
    p2 = jnp.transpose(points2, (0, 2, 1))
    B, N, _ = x1.shape
    S = x2.shape[1]
    if S == 1:
        interp = jnp.broadcast_to(p2, (B, N, p2.shape[-1]))
    else:
        dists = (-2.0 * jnp.einsum("bnc,bmc->bnm", x1, x2, precision="highest")
                 + jnp.sum(x1 ** 2, -1)[:, :, None]
                 + jnp.sum(x2 ** 2, -1)[:, None, :])
        idx = jnp.argsort(dists, axis=-1)[:, :, :3]
        d3 = jnp.take_along_axis(dists, idx, axis=-1)
        d3 = jnp.maximum(d3, 0.0)   # same clamp of rounding artifacts as the kernel
        recip = 1.0 / (d3 + 1e-8)
        weight = recip / jnp.sum(recip, -1, keepdims=True)
        gathered = jax.vmap(lambda pts, ix: pts[ix])(p2, idx)     # (B,N,3,D2)
        interp = jnp.sum(gathered * weight[..., None], axis=2)
    if points1 is not None:
        p1 = jnp.transpose(points1, (0, 2, 1))
        x = jnp.concatenate([p1, interp], axis=-1)
    else:
        x = interp
    for p in params:
        y = jnp.einsum("bnc,oc->bno", x, p["w"], precision="highest") + p["b"]
        y = (y - p["mean"]) / jnp.sqrt(p["var"] + BN_EPS) * p["gamma"] + p["beta"]
        x = jnp.maximum(y, 0.0)
    return jnp.transpose(x, (0, 2, 1))


# ---------------------------------------------------------------------------
if __name__ == "__main__":
    key = jax.random.PRNGKey(0)
    B, N, S, D1, D2 = 2, 16, 8, 4, 4
    mlp = [32, 16]
    in_channel = D1 + D2

    k1, k2, k3, k4, k5 = jax.random.split(key, 5)
    xyz1 = jax.random.normal(k1, (B, 3, N), jnp.float32)
    xyz2 = jax.random.normal(k2, (B, 3, S), jnp.float32)
    points1 = jax.random.normal(k3, (B, D1, N), jnp.float32)
    points2 = jax.random.normal(k4, (B, D2, S), jnp.float32)
    params = init_fea_propagate(k5, in_channel, mlp)

    out = fea_propagate_forward(params, xyz1, xyz2, points1, points2)
    out = jax.block_until_ready(out)

    ref = reference_forward(params, xyz1, xyz2, points1, points2)
    assert out.shape == (B, mlp[-1], N), out.shape
    # bf16 weights / points / matmuls with f32 accumulation -> loose tolerance
    max_err = float(jnp.max(jnp.abs(out - ref)))
    assert max_err < 3e-2, f"max abs err {max_err}"
    print("KERNEL_OK")
</pallas_src>

<mosaic_0001>
module attributes {stable_mosaic.version = 11 : i64} {
  func.func @kernel(%arg0: i32, %arg1: i32, %arg2: memref<1x3x16xf32, #tpu.memory_space<vmem>>, %arg3: memref<1x3x8xf32, #tpu.memory_space<vmem>>, %arg4: memref<1x4x8xbf16, #tpu.memory_space<vmem>>, %arg5: memref<1x4x16xbf16, #tpu.memory_space<vmem>>, %arg6: memref<32x4xbf16, #tpu.memory_space<vmem>>, %arg7: memref<32x4xbf16, #tpu.memory_space<vmem>>, %arg8: memref<32x1xf32, #tpu.memory_space<vmem>>, %arg9: memref<16x32xbf16, #tpu.memory_space<vmem>>, %arg10: memref<16x1xf32, #tpu.memory_space<vmem>>, %arg11: memref<1x16x16xf32, #tpu.memory_space<vmem>>) attributes {dimension_semantics = [#tpu.dimension_semantics<parallel>, #tpu.dimension_semantics<parallel>], iteration_bounds = array<i64: 2, 1>, scalar_prefetch = 0 : i64, scratch_operands = 0 : i64, tpu.core_type = #tpu.core_type<tc>, window_params = [{transform_indices = @transform_0, window_bounds = array<i64: 1, 3, 16>}, {pipeline_mode = #tpu.pipeline_mode<synchronous>, transform_indices = @transform_1, window_bounds = array<i64: 1, 3, 8>}, {pipeline_mode = #tpu.pipeline_mode<synchronous>, transform_indices = @transform_2, window_bounds = array<i64: 1, 4, 8>}, {transform_indices = @transform_3, window_bounds = array<i64: 1, 4, 16>}, {pipeline_mode = #tpu.pipeline_mode<synchronous>, transform_indices = @transform_4, window_bounds = array<i64: 32, 4>}, {pipeline_mode = #tpu.pipeline_mode<synchronous>, transform_indices = @transform_5, window_bounds = array<i64: 32, 4>}, {pipeline_mode = #tpu.pipeline_mode<synchronous>, transform_indices = @transform_6, window_bounds = array<i64: 32, 1>}, {pipeline_mode = #tpu.pipeline_mode<synchronous>, transform_indices = @transform_7, window_bounds = array<i64: 16, 32>}, {pipeline_mode = #tpu.pipeline_mode<synchronous>, transform_indices = @transform_8, window_bounds = array<i64: 16, 1>}, {transform_indices = @transform_9, window_bounds = array<i64: 1, 16, 16>}]} {
    %c0 = arith.constant 0 : index
    %c0_0 = arith.constant 0 : index
    %c0_1 = arith.constant 0 : index
    %0 = vector.load %arg2[%c0, %c0_0, %c0_1] : memref<1x3x16xf32, #tpu.memory_space<vmem>>, vector<1x3x16xf32>
    %1 = vector.shape_cast %0 : vector<1x3x16xf32> to vector<3x16xf32>
    %c0_2 = arith.constant 0 : index
    %c0_3 = arith.constant 0 : index
    %c0_4 = arith.constant 0 : index
    %2 = vector.load %arg3[%c0_2, %c0_3, %c0_4] : memref<1x3x8xf32, #tpu.memory_space<vmem>>, vector<1x3x8xf32>
    %3 = vector.shape_cast %2 : vector<1x3x8xf32> to vector<3x8xf32>
    %c0_5 = arith.constant 0 : index
    %c0_6 = arith.constant 0 : index
    %c0_7 = arith.constant 0 : index
    %4 = vector.load %arg4[%c0_5, %c0_6, %c0_7] : memref<1x4x8xbf16, #tpu.memory_space<vmem>>, vector<1x4x8xbf16>
    %5 = vector.shape_cast %4 : vector<1x4x8xbf16> to vector<4x8xbf16>
    %c0_8 = arith.constant 0 : index
    %c0_9 = arith.constant 0 : index
    %c0_10 = arith.constant 0 : index
    %6 = vector.load %arg5[%c0_8, %c0_9, %c0_10] : memref<1x4x16xbf16, #tpu.memory_space<vmem>>, vector<1x4x16xbf16>
    %7 = vector.shape_cast %6 : vector<1x4x16xbf16> to vector<4x16xbf16>
    %8 = tpu.transpose %1, [1, 0] : vector<3x16xf32> -> vector<16x3xf32>
    %9 = arith.mulf %8, %8 : vector<16x3xf32>
    %cst = arith.constant dense<0.000000e+00> : vector<16xf32>
    %10 = vector.multi_reduction <add>, %9, %cst [1] : vector<16x3xf32> to vector<16xf32>
    %11 = vector.shape_cast %10 : vector<16xf32> to vector<16x1xf32>
    %12 = arith.mulf %3, %3 : vector<3x8xf32>
    %cst_11 = arith.constant dense<0.000000e+00> : vector<8xf32>
    %13 = vector.multi_reduction <add>, %12, %cst_11 [0] : vector<3x8xf32> to vector<8xf32>
    %cst_12 = arith.constant dense<0.000000e+00> : vector<16x8xf32>
    %14 = tpu.matmul %8, %3, %cst_12 {dimension_numbers = #tpu.dot_dimension_numbers<[1], [0], [0], [1], [0, 0, 1, 1], [], []>} : vector<16x3xf32>, vector<3x8xf32>, vector<16x8xf32> -> vector<16x8xf32>
    %15 = vector.shape_cast %13 : vector<8xf32> to vector<1x8xf32>
    %cst_13 = arith.constant 2.000000e+00 : f32
    %16 = vector.broadcast %cst_13 : f32 to vector<16x8xf32>
    %17 = arith.mulf %16, %14 : vector<16x8xf32>
    %18 = vector.broadcast %15 : vector<1x8xf32> to vector<16x8xf32>
    %19 = arith.subf %18, %17 : vector<16x8xf32>
    %20 = tpu.iota {dimensions = array<i32: 1>} : vector<16x8xi32>
    %cst_14 = arith.constant 0.000000e+00 : f32
    %21 = vector.broadcast %cst_14 : f32 to vector<16x8xf32>
    %cst_15 = arith.constant 0.000000e+00 : f32
    %22 = vector.broadcast %cst_15 : f32 to vector<16x1xf32>
    %cst_16 = arith.constant dense<0x7F800000> : vector<16xf32>
    %23 = vector.multi_reduction <minimumf>, %19, %cst_16 [1] : vector<16x8xf32> to vector<16xf32>
    %24 = vector.shape_cast %23 : vector<16xf32> to vector<16x1xf32>
    %25 = vector.broadcast %24 : vector<16x1xf32> to vector<16x8xf32>
    %26 = arith.cmpf oeq, %19, %25 : vector<16x8xf32>
    %c8_i32 = arith.constant 8 : i32
    %27 = vector.broadcast %c8_i32 : i32 to vector<16x8xi32>
    %28 = arith.select %26, %20, %27 : vector<16x8xi1>, vector<16x8xi32>
    %cst_17 = arith.constant dense<2147483647> : vector<16xi32>
    %29 = vector.multi_reduction <minsi>, %28, %cst_17 [1] : vector<16x8xi32> to vector<16xi32>
    %30 = vector.shape_cast %29 : vector<16xi32> to vector<16x1xi32>
    %31 = vector.broadcast %30 : vector<16x1xi32> to vector<16x8xi32>
    %32 = arith.cmpi eq, %20, %31 : vector<16x8xi32>
    %33 = arith.addf %24, %11 : vector<16x1xf32>
    %cst_18 = arith.constant 0.000000e+00 : f32
    %34 = vector.broadcast %cst_18 : f32 to vector<16x1xf32>
    %35 = arith.maximumf %33, %34 : vector<16x1xf32>
    %cst_19 = arith.constant 9.99999993E-9 : f32
    %36 = vector.broadcast %cst_19 : f32 to vector<16x1xf32>
    %37 = arith.addf %35, %36 : vector<16x1xf32>
    %cst_20 = arith.constant 1.000000e+00 : f32
    %38 = vector.broadcast %cst_20 : f32 to vector<16x1xf32>
    %39 = arith.divf %38, %37 : vector<16x1xf32>
    %cst_21 = arith.constant 0.000000e+00 : f32
    %40 = vector.shape_cast %39 : vector<16x1xf32> to vector<16x1xf32>
    %41 = vector.broadcast %40 : vector<16x1xf32> to vector<16x8xf32>
    %42 = vector.broadcast %cst_21 : f32 to vector<16x8xf32>
    %43 = arith.select %32, %41, %42 : vector<16x8xi1>, vector<16x8xf32>
    %44 = arith.addf %21, %43 : vector<16x8xf32>
    %45 = arith.addf %22, %39 : vector<16x1xf32>
    %cst_22 = arith.constant 0x7F800000 : f32
    %46 = vector.broadcast %cst_22 : f32 to vector<16x8xf32>
    %47 = arith.select %32, %46, %19 : vector<16x8xi1>, vector<16x8xf32>
    %cst_23 = arith.constant dense<0x7F800000> : vector<16xf32>
    %48 = vector.multi_reduction <minimumf>, %47, %cst_23 [1] : vector<16x8xf32> to vector<16xf32>
    %49 = vector.shape_cast %48 : vector<16xf32> to vector<16x1xf32>
    %50 = vector.broadcast %49 : vector<16x1xf32> to vector<16x8xf32>
    %51 = arith.cmpf oeq, %47, %50 : vector<16x8xf32>
    %c8_i32_24 = arith.constant 8 : i32
    %52 = vector.broadcast %c8_i32_24 : i32 to vector<16x8xi32>
    %53 = arith.select %51, %20, %52 : vector<16x8xi1>, vector<16x8xi32>
    %cst_25 = arith.constant dense<2147483647> : vector<16xi32>
    %54 = vector.multi_reduction <minsi>, %53, %cst_25 [1] : vector<16x8xi32> to vector<16xi32>
    %55 = vector.shape_cast %54 : vector<16xi32> to vector<16x1xi32>
    %56 = vector.broadcast %55 : vector<16x1xi32> to vector<16x8xi32>
    %57 = arith.cmpi eq, %20, %56 : vector<16x8xi32>
    %58 = arith.addf %49, %11 : vector<16x1xf32>
    %cst_26 = arith.constant 0.000000e+00 : f32
    %59 = vector.broadcast %cst_26 : f32 to vector<16x1xf32>
    %60 = arith.maximumf %58, %59 : vector<16x1xf32>
    %cst_27 = arith.constant 9.99999993E-9 : f32
    %61 = vector.broadcast %cst_27 : f32 to vector<16x1xf32>
    %62 = arith.addf %60, %61 : vector<16x1xf32>
    %cst_28 = arith.constant 1.000000e+00 : f32
    %63 = vector.broadcast %cst_28 : f32 to vector<16x1xf32>
    %64 = arith.divf %63, %62 : vector<16x1xf32>
    %cst_29 = arith.constant 0.000000e+00 : f32
    %65 = vector.shape_cast %64 : vector<16x1xf32> to vector<16x1xf32>
    %66 = vector.broadcast %65 : vector<16x1xf32> to vector<16x8xf32>
    %67 = vector.broadcast %cst_29 : f32 to vector<16x8xf32>
    %68 = arith.select %57, %66, %67 : vector<16x8xi1>, vector<16x8xf32>
    %69 = arith.addf %44, %68 : vector<16x8xf32>
    %70 = arith.addf %45, %64 : vector<16x1xf32>
    %cst_30 = arith.constant 0x7F800000 : f32
    %71 = vector.broadcast %cst_30 : f32 to vector<16x8xf32>
    %72 = arith.select %57, %71, %47 : vector<16x8xi1>, vector<16x8xf32>
    %cst_31 = arith.constant dense<0x7F800000> : vector<16xf32>
    %73 = vector.multi_reduction <minimumf>, %72, %cst_31 [1] : vector<16x8xf32> to vector<16xf32>
    %74 = vector.shape_cast %73 : vector<16xf32> to vector<16x1xf32>
    %75 = vector.broadcast %74 : vector<16x1xf32> to vector<16x8xf32>
    %76 = arith.cmpf oeq, %72, %75 : vector<16x8xf32>
    %c8_i32_32 = arith.constant 8 : i32
    %77 = vector.broadcast %c8_i32_32 : i32 to vector<16x8xi32>
    %78 = arith.select %76, %20, %77 : vector<16x8xi1>, vector<16x8xi32>
    %cst_33 = arith.constant dense<2147483647> : vector<16xi32>
    %79 = vector.multi_reduction <minsi>, %78, %cst_33 [1] : vector<16x8xi32> to vector<16xi32>
    %80 = vector.shape_cast %79 : vector<16xi32> to vector<16x1xi32>
    %81 = vector.broadcast %80 : vector<16x1xi32> to vector<16x8xi32>
    %82 = arith.cmpi eq, %20, %81 : vector<16x8xi32>
    %83 = arith.addf %74, %11 : vector<16x1xf32>
    %cst_34 = arith.constant 0.000000e+00 : f32
    %84 = vector.broadcast %cst_34 : f32 to vector<16x1xf32>
    %85 = arith.maximumf %83, %84 : vector<16x1xf32>
    %cst_35 = arith.constant 9.99999993E-9 : f32
    %86 = vector.broadcast %cst_35 : f32 to vector<16x1xf32>
    %87 = arith.addf %85, %86 : vector<16x1xf32>
    %cst_36 = arith.constant 1.000000e+00 : f32
    %88 = vector.broadcast %cst_36 : f32 to vector<16x1xf32>
    %89 = arith.divf %88, %87 : vector<16x1xf32>
    %cst_37 = arith.constant 0.000000e+00 : f32
    %90 = vector.shape_cast %89 : vector<16x1xf32> to vector<16x1xf32>
    %91 = vector.broadcast %90 : vector<16x1xf32> to vector<16x8xf32>
    %92 = vector.broadcast %cst_37 : f32 to vector<16x8xf32>
    %93 = arith.select %82, %91, %92 : vector<16x8xi1>, vector<16x8xf32>
    %94 = arith.addf %69, %93 : vector<16x8xf32>
    %95 = arith.addf %70, %89 : vector<16x1xf32>
    %cst_38 = arith.constant 1.000000e+00 : f32
    %96 = vector.broadcast %cst_38 : f32 to vector<16x1xf32>
    %97 = arith.divf %96, %95 : vector<16x1xf32>
    %98 = vector.broadcast %97 : vector<16x1xf32> to vector<16x8xf32>
    %99 = arith.mulf %94, %98 : vector<16x8xf32>
    %100 = arith.truncf %99 : vector<16x8xf32> to vector<16x8xbf16>
    %cst_39 = arith.constant dense<0.000000e+00> : vector<4x16xf32>
    %101 = tpu.matmul %5, %100, %cst_39 {dimension_numbers = #tpu.dot_dimension_numbers<[1], [1], [0], [0], [0, 0, 1, 0], [], []>} : vector<4x8xbf16>, vector<16x8xbf16>, vector<4x16xf32> -> vector<4x16xf32>
    %102 = arith.truncf %101 : vector<4x16xf32> to vector<4x16xbf16>
    %c0_40 = arith.constant 0 : index
    %c0_41 = arith.constant 0 : index
    %103 = vector.load %arg6[%c0_40, %c0_41] : memref<32x4xbf16, #tpu.memory_space<vmem>>, vector<32x4xbf16>
    %c0_42 = arith.constant 0 : index
    %c0_43 = arith.constant 0 : index
    %104 = vector.load %arg7[%c0_42, %c0_43] : memref<32x4xbf16, #tpu.memory_space<vmem>>, vector<32x4xbf16>
    %c0_44 = arith.constant 0 : index
    %c0_45 = arith.constant 0 : index
    %105 = vector.load %arg8[%c0_44, %c0_45] : memref<32x1xf32, #tpu.memory_space<vmem>>, vector<32x1xf32>
    %cst_46 = arith.constant dense<0.000000e+00> : vector<32x16xf32>
    %106 = tpu.matmul %103, %7, %cst_46 {dimension_numbers = #tpu.dot_dimension_numbers<[1], [0], [0], [1], [0, 0, 1, 1], [], []>} : vector<32x4xbf16>, vector<4x16xbf16>, vector<32x16xf32> -> vector<32x16xf32>
    %cst_47 = arith.constant dense<0.000000e+00> : vector<32x16xf32>
    %107 = tpu.matmul %104, %102, %cst_47 {dimension_numbers = #tpu.dot_dimension_numbers<[1], [0], [0], [1], [0, 0, 1, 1], [], []>} : vector<32x4xbf16>, vector<4x16xbf16>, vector<32x16xf32> -> vector<32x16xf32>
    %108 = arith.addf %106, %107 : vector<32x16xf32>
    %109 = vector.broadcast %105 : vector<32x1xf32> to vector<32x16xf32>
    %110 = arith.addf %108, %109 : vector<32x16xf32>
    %cst_48 = arith.constant 0.000000e+00 : f32
    %111 = vector.broadcast %cst_48 : f32 to vector<32x16xf32>
    %112 = arith.maximumf %110, %111 : vector<32x16xf32>
    %c0_49 = arith.constant 0 : index
    %c0_50 = arith.constant 0 : index
    %113 = vector.load %arg9[%c0_49, %c0_50] : memref<16x32xbf16, #tpu.memory_space<vmem>>, vector<16x32xbf16>
    %c0_51 = arith.constant 0 : index
    %c0_52 = arith.constant 0 : index
    %114 = vector.load %arg10[%c0_51, %c0_52] : memref<16x1xf32, #tpu.memory_space<vmem>>, vector<16x1xf32>
    %115 = arith.truncf %112 : vector<32x16xf32> to vector<32x16xbf16>
    %cst_53 = arith.constant dense<0.000000e+00> : vector<16x16xf32>
    %116 = tpu.matmul %113, %115, %cst_53 {dimension_numbers = #tpu.dot_dimension_numbers<[1], [0], [0], [1], [0, 0, 1, 1], [], []>} : vector<16x32xbf16>, vector<32x16xbf16>, vector<16x16xf32> -> vector<16x16xf32>
    %117 = vector.broadcast %114 : vector<16x1xf32> to vector<16x16xf32>
    %118 = arith.addf %116, %117 : vector<16x16xf32>
    %cst_54 = arith.constant 0.000000e+00 : f32
    %119 = vector.broadcast %cst_54 : f32 to vector<16x16xf32>
    %120 = arith.maximumf %118, %119 : vector<16x16xf32>
    %c0_55 = arith.constant 0 : index
    %c0_56 = arith.constant 0 : index
    %c0_57 = arith.constant 0 : index
    %121 = vector.load %arg11[%c0_55, %c0_56, %c0_57] : memref<1x16x16xf32, #tpu.memory_space<vmem>>, vector<1x16x16xf32>
    %122 = vector.shape_cast %121 : vector<1x16x16xf32> to vector<16x16xf32>
    %123 = vector.shape_cast %120 : vector<16x16xf32> to vector<1x16x16xf32>
    tpu.vector_store %arg11[%c0_55, %c0_56, %c0_57], %123 {strides = array<i32>} : memref<1x16x16xf32, #tpu.memory_space<vmem>>, vector<1x16x16xf32>,
    return
  }
  func.func @transform_0(%arg0: i32, %arg1: i32) -> (i32, i32, i32) {
    %c0_i32 = arith.constant 0 : i32
    %c0_i32_0 = arith.constant 0 : i32
    return %arg0, %c0_i32, %arg1 : i32, i32, i32
  }
  func.func @transform_1(%arg0: i32, %arg1: i32) -> (i32, i32, i32) {
    %c0_i32 = arith.constant 0 : i32
    %c0_i32_0 = arith.constant 0 : i32
    %c0_i32_1 = arith.constant 0 : i32
    return %arg0, %c0_i32, %c0_i32_0 : i32, i32, i32
  }
  func.func @transform_2(%arg0: i32, %arg1: i32) -> (i32, i32, i32) {
    %c0_i32 = arith.constant 0 : i32
    %c0_i32_0 = arith.constant 0 : i32
    %c0_i32_1 = arith.constant 0 : i32
    return %arg0, %c0_i32, %c0_i32_0 : i32, i32, i32
  }
  func.func @transform_3(%arg0: i32, %arg1: i32) -> (i32, i32, i32) {
    %c0_i32 = arith.constant 0 : i32
    %c0_i32_0 = arith.constant 0 : i32
    return %arg0, %c0_i32, %arg1 : i32, i32, i32
  }
  func.func @transform_4(%arg0: i32, %arg1: i32) -> (i32, i32) {
    %c0_i32 = arith.constant 0 : i32
    %c0_i32_0 = arith.constant 0 : i32
    %c0_i32_1 = arith.constant 0 : i32
    return %c0_i32, %c0_i32_0 : i32, i32
  }
  func.func @transform_5(%arg0: i32, %arg1: i32) -> (i32, i32) {
    %c0_i32 = arith.constant 0 : i32
    %c0_i32_0 = arith.constant 0 : i32
    %c0_i32_1 = arith.constant 0 : i32
    return %c0_i32, %c0_i32_0 : i32, i32
  }
  func.func @transform_6(%arg0: i32, %arg1: i32) -> (i32, i32) {
    %c0_i32 = arith.constant 0 : i32
    %c0_i32_0 = arith.constant 0 : i32
    %c0_i32_1 = arith.constant 0 : i32
    return %c0_i32, %c0_i32_0 : i32, i32
  }
  func.func @transform_7(%arg0: i32, %arg1: i32) -> (i32, i32) {
    %c0_i32 = arith.constant 0 : i32
    %c0_i32_0 = arith.constant 0 : i32
    %c0_i32_1 = arith.constant 0 : i32
    return %c0_i32, %c0_i32_0 : i32, i32
  }
  func.func @transform_8(%arg0: i32, %arg1: i32) -> (i32, i32) {
    %c0_i32 = arith.constant 0 : i32
    %c0_i32_0 = arith.constant 0 : i32
    %c0_i32_1 = arith.constant 0 : i32
    return %c0_i32, %c0_i32_0 : i32, i32
  }
  func.func @transform_9(%arg0: i32, %arg1: i32) -> (i32, i32, i32) {
    %c0_i32 = arith.constant 0 : i32
    %c0_i32_0 = arith.constant 0 : i32
    return %arg0, %c0_i32, %arg1 : i32, i32, i32
  }
}

module attributes {stable_mosaic.version = 11 : i64} {
  func.func @kernel(%arg0: i32, %arg1: i32, %arg2: memref<1x3x16xf32, #tpu.memory_space<vmem>>, %arg3: memref<1x3x8xf32, #tpu.memory_space<vmem>>, %arg4: memref<1x4x8xbf16, #tpu.memory_space<vmem>>, %arg5: memref<1x4x16xbf16, #tpu.memory_space<vmem>>, %arg6: memref<32x4xbf16, #tpu.memory_space<vmem>>, %arg7: memref<32x4xbf16, #tpu.memory_space<vmem>>, %arg8: memref<32x1xf32, #tpu.memory_space<vmem>>, %arg9: memref<16x32xbf16, #tpu.memory_space<vmem>>, %arg10: memref<16x1xf32, #tpu.memory_space<vmem>>, %arg11: memref<1x16x16xf32, #tpu.memory_space<vmem>>) attributes {dimension_semantics = [#tpu.dimension_semantics<parallel>, #tpu.dimension_semantics<parallel>], iteration_bounds = array<i64: 2, 1>, scalar_prefetch = 0 : i64, scratch_operands = 0 : i64, tpu.core_type = #tpu.core_type<tc>, window_params = [{transform_indices = @transform_0, window_bounds = array<i64: 1, 3, 16>}, {transform_indices = @transform_1, window_bounds = array<i64: 1, 3, 8>}, {transform_indices = @transform_2, window_bounds = array<i64: 1, 4, 8>}, {transform_indices = @transform_3, window_bounds = array<i64: 1, 4, 16>}, {pipeline_mode = #tpu.pipeline_mode<synchronous>, transform_indices = @transform_4, window_bounds = array<i64: 32, 4>}, {pipeline_mode = #tpu.pipeline_mode<synchronous>, transform_indices = @transform_5, window_bounds = array<i64: 32, 4>}, {pipeline_mode = #tpu.pipeline_mode<synchronous>, transform_indices = @transform_6, window_bounds = array<i64: 32, 1>}, {pipeline_mode = #tpu.pipeline_mode<synchronous>, transform_indices = @transform_7, window_bounds = array<i64: 16, 32>}, {pipeline_mode = #tpu.pipeline_mode<synchronous>, transform_indices = @transform_8, window_bounds = array<i64: 16, 1>}, {transform_indices = @transform_9, window_bounds = array<i64: 1, 16, 16>}]} {
    %c0 = arith.constant 0 : index
    %c0_0 = arith.constant 0 : index
    %c0_1 = arith.constant 0 : index
    %0 = vector.load %arg2[%c0, %c0_0, %c0_1] : memref<1x3x16xf32, #tpu.memory_space<vmem>>, vector<1x3x16xf32>
    %1 = vector.shape_cast %0 : vector<1x3x16xf32> to vector<3x16xf32>
    %c0_2 = arith.constant 0 : index
    %c0_3 = arith.constant 0 : index
    %c0_4 = arith.constant 0 : index
    %2 = vector.load %arg3[%c0_2, %c0_3, %c0_4] : memref<1x3x8xf32, #tpu.memory_space<vmem>>, vector<1x3x8xf32>
    %3 = vector.shape_cast %2 : vector<1x3x8xf32> to vector<3x8xf32>
    %c0_5 = arith.constant 0 : index
    %c0_6 = arith.constant 0 : index
    %c0_7 = arith.constant 0 : index
    %4 = vector.load %arg4[%c0_5, %c0_6, %c0_7] : memref<1x4x8xbf16, #tpu.memory_space<vmem>>, vector<1x4x8xbf16>
    %5 = vector.shape_cast %4 : vector<1x4x8xbf16> to vector<4x8xbf16>
    %c0_8 = arith.constant 0 : index
    %c0_9 = arith.constant 0 : index
    %c0_10 = arith.constant 0 : index
    %6 = vector.load %arg5[%c0_8, %c0_9, %c0_10] : memref<1x4x16xbf16, #tpu.memory_space<vmem>>, vector<1x4x16xbf16>
    %7 = vector.shape_cast %6 : vector<1x4x16xbf16> to vector<4x16xbf16>
    %8 = tpu.transpose %1, [1, 0] : vector<3x16xf32> -> vector<16x3xf32>
    %9 = arith.mulf %8, %8 : vector<16x3xf32>
    %cst = arith.constant dense<0.000000e+00> : vector<16xf32>
    %10 = vector.multi_reduction <add>, %9, %cst [1] : vector<16x3xf32> to vector<16xf32>
    %11 = vector.shape_cast %10 : vector<16xf32> to vector<16x1xf32>
    %12 = arith.mulf %3, %3 : vector<3x8xf32>
    %cst_11 = arith.constant dense<0.000000e+00> : vector<8xf32>
    %13 = vector.multi_reduction <add>, %12, %cst_11 [0] : vector<3x8xf32> to vector<8xf32>
    %cst_12 = arith.constant dense<0.000000e+00> : vector<16x8xf32>
    %14 = tpu.matmul %8, %3, %cst_12 {dimension_numbers = #tpu.dot_dimension_numbers<[1], [0], [0], [1], [0, 0, 1, 1], [], []>} : vector<16x3xf32>, vector<3x8xf32>, vector<16x8xf32> -> vector<16x8xf32>
    %15 = vector.shape_cast %13 : vector<8xf32> to vector<1x8xf32>
    %cst_13 = arith.constant 2.000000e+00 : f32
    %16 = vector.broadcast %cst_13 : f32 to vector<16x8xf32>
    %17 = arith.mulf %16, %14 : vector<16x8xf32>
    %18 = vector.broadcast %15 : vector<1x8xf32> to vector<16x8xf32>
    %19 = arith.subf %18, %17 : vector<16x8xf32>
    %20 = tpu.iota {dimensions = array<i32: 1>} : vector<16x8xi32>
    %cst_14 = arith.constant 0.000000e+00 : f32
    %21 = vector.broadcast %cst_14 : f32 to vector<16x8xf32>
    %cst_15 = arith.constant 0.000000e+00 : f32
    %22 = vector.broadcast %cst_15 : f32 to vector<16x1xf32>
    %cst_16 = arith.constant dense<0x7F800000> : vector<16xf32>
    %23 = vector.multi_reduction <minimumf>, %19, %cst_16 [1] : vector<16x8xf32> to vector<16xf32>
    %24 = vector.shape_cast %23 : vector<16xf32> to vector<16x1xf32>
    %25 = vector.broadcast %24 : vector<16x1xf32> to vector<16x8xf32>
    %26 = arith.cmpf oeq, %19, %25 : vector<16x8xf32>
    %c8_i32 = arith.constant 8 : i32
    %27 = vector.broadcast %c8_i32 : i32 to vector<16x8xi32>
    %28 = arith.select %26, %20, %27 : vector<16x8xi1>, vector<16x8xi32>
    %cst_17 = arith.constant dense<2147483647> : vector<16xi32>
    %29 = vector.multi_reduction <minsi>, %28, %cst_17 [1] : vector<16x8xi32> to vector<16xi32>
    %30 = vector.shape_cast %29 : vector<16xi32> to vector<16x1xi32>
    %31 = vector.broadcast %30 : vector<16x1xi32> to vector<16x8xi32>
    %32 = arith.cmpi eq, %20, %31 : vector<16x8xi32>
    %33 = arith.addf %24, %11 : vector<16x1xf32>
    %cst_18 = arith.constant 0.000000e+00 : f32
    %34 = vector.broadcast %cst_18 : f32 to vector<16x1xf32>
    %35 = arith.maximumf %33, %34 : vector<16x1xf32>
    %cst_19 = arith.constant 9.99999993E-9 : f32
    %36 = vector.broadcast %cst_19 : f32 to vector<16x1xf32>
    %37 = arith.addf %35, %36 : vector<16x1xf32>
    %cst_20 = arith.constant 1.000000e+00 : f32
    %38 = vector.broadcast %cst_20 : f32 to vector<16x1xf32>
    %39 = arith.divf %38, %37 : vector<16x1xf32>
    %cst_21 = arith.constant 0.000000e+00 : f32
    %40 = vector.shape_cast %39 : vector<16x1xf32> to vector<16x1xf32>
    %41 = vector.broadcast %40 : vector<16x1xf32> to vector<16x8xf32>
    %42 = vector.broadcast %cst_21 : f32 to vector<16x8xf32>
    %43 = arith.select %32, %41, %42 : vector<16x8xi1>, vector<16x8xf32>
    %44 = arith.addf %21, %43 : vector<16x8xf32>
    %45 = arith.addf %22, %39 : vector<16x1xf32>
    %cst_22 = arith.constant 0x7F800000 : f32
    %46 = vector.broadcast %cst_22 : f32 to vector<16x8xf32>
    %47 = arith.select %32, %46, %19 : vector<16x8xi1>, vector<16x8xf32>
    %cst_23 = arith.constant dense<0x7F800000> : vector<16xf32>
    %48 = vector.multi_reduction <minimumf>, %47, %cst_23 [1] : vector<16x8xf32> to vector<16xf32>
    %49 = vector.shape_cast %48 : vector<16xf32> to vector<16x1xf32>
    %50 = vector.broadcast %49 : vector<16x1xf32> to vector<16x8xf32>
    %51 = arith.cmpf oeq, %47, %50 : vector<16x8xf32>
    %c8_i32_24 = arith.constant 8 : i32
    %52 = vector.broadcast %c8_i32_24 : i32 to vector<16x8xi32>
    %53 = arith.select %51, %20, %52 : vector<16x8xi1>, vector<16x8xi32>
    %cst_25 = arith.constant dense<2147483647> : vector<16xi32>
    %54 = vector.multi_reduction <minsi>, %53, %cst_25 [1] : vector<16x8xi32> to vector<16xi32>
    %55 = vector.shape_cast %54 : vector<16xi32> to vector<16x1xi32>
    %56 = vector.broadcast %55 : vector<16x1xi32> to vector<16x8xi32>
    %57 = arith.cmpi eq, %20, %56 : vector<16x8xi32>
    %58 = arith.addf %49, %11 : vector<16x1xf32>
    %cst_26 = arith.constant 0.000000e+00 : f32
    %59 = vector.broadcast %cst_26 : f32 to vector<16x1xf32>
    %60 = arith.maximumf %58, %59 : vector<16x1xf32>
    %cst_27 = arith.constant 9.99999993E-9 : f32
    %61 = vector.broadcast %cst_27 : f32 to vector<16x1xf32>
    %62 = arith.addf %60, %61 : vector<16x1xf32>
    %cst_28 = arith.constant 1.000000e+00 : f32
    %63 = vector.broadcast %cst_28 : f32 to vector<16x1xf32>
    %64 = arith.divf %63, %62 : vector<16x1xf32>
    %cst_29 = arith.constant 0.000000e+00 : f32
    %65 = vector.shape_cast %64 : vector<16x1xf32> to vector<16x1xf32>
    %66 = vector.broadcast %65 : vector<16x1xf32> to vector<16x8xf32>
    %67 = vector.broadcast %cst_29 : f32 to vector<16x8xf32>
    %68 = arith.select %57, %66, %67 : vector<16x8xi1>, vector<16x8xf32>
    %69 = arith.addf %44, %68 : vector<16x8xf32>
    %70 = arith.addf %45, %64 : vector<16x1xf32>
    %cst_30 = arith.constant 0x7F800000 : f32
    %71 = vector.broadcast %cst_30 : f32 to vector<16x8xf32>
    %72 = arith.select %57, %71, %47 : vector<16x8xi1>, vector<16x8xf32>
    %cst_31 = arith.constant dense<0x7F800000> : vector<16xf32>
    %73 = vector.multi_reduction <minimumf>, %72, %cst_31 [1] : vector<16x8xf32> to vector<16xf32>
    %74 = vector.shape_cast %73 : vector<16xf32> to vector<16x1xf32>
    %75 = vector.broadcast %74 : vector<16x1xf32> to vector<16x8xf32>
    %76 = arith.cmpf oeq, %72, %75 : vector<16x8xf32>
    %c8_i32_32 = arith.constant 8 : i32
    %77 = vector.broadcast %c8_i32_32 : i32 to vector<16x8xi32>
    %78 = arith.select %76, %20, %77 : vector<16x8xi1>, vector<16x8xi32>
    %cst_33 = arith.constant dense<2147483647> : vector<16xi32>
    %79 = vector.multi_reduction <minsi>, %78, %cst_33 [1] : vector<16x8xi32> to vector<16xi32>
    %80 = vector.shape_cast %79 : vector<16xi32> to vector<16x1xi32>
    %81 = vector.broadcast %80 : vector<16x1xi32> to vector<16x8xi32>
    %82 = arith.cmpi eq, %20, %81 : vector<16x8xi32>
    %83 = arith.addf %74, %11 : vector<16x1xf32>
    %cst_34 = arith.constant 0.000000e+00 : f32
    %84 = vector.broadcast %cst_34 : f32 to vector<16x1xf32>
    %85 = arith.maximumf %83, %84 : vector<16x1xf32>
    %cst_35 = arith.constant 9.99999993E-9 : f32
    %86 = vector.broadcast %cst_35 : f32 to vector<16x1xf32>
    %87 = arith.addf %85, %86 : vector<16x1xf32>
    %cst_36 = arith.constant 1.000000e+00 : f32
    %88 = vector.broadcast %cst_36 : f32 to vector<16x1xf32>
    %89 = arith.divf %88, %87 : vector<16x1xf32>
    %cst_37 = arith.constant 0.000000e+00 : f32
    %90 = vector.shape_cast %89 : vector<16x1xf32> to vector<16x1xf32>
    %91 = vector.broadcast %90 : vector<16x1xf32> to vector<16x8xf32>
    %92 = vector.broadcast %cst_37 : f32 to vector<16x8xf32>
    %93 = arith.select %82, %91, %92 : vector<16x8xi1>, vector<16x8xf32>
    %94 = arith.addf %69, %93 : vector<16x8xf32>
    %95 = arith.addf %70, %89 : vector<16x1xf32>
    %cst_38 = arith.constant 1.000000e+00 : f32
    %96 = vector.broadcast %cst_38 : f32 to vector<16x1xf32>
    %97 = arith.divf %96, %95 : vector<16x1xf32>
    %98 = vector.broadcast %97 : vector<16x1xf32> to vector<16x8xf32>
    %99 = arith.mulf %94, %98 : vector<16x8xf32>
    %100 = arith.truncf %99 : vector<16x8xf32> to vector<16x8xbf16>
    %cst_39 = arith.constant dense<0.000000e+00> : vector<4x16xf32>
    %101 = tpu.matmul %5, %100, %cst_39 {dimension_numbers = #tpu.dot_dimension_numbers<[1], [1], [0], [0], [0, 0, 1, 0], [], []>} : vector<4x8xbf16>, vector<16x8xbf16>, vector<4x16xf32> -> vector<4x16xf32>
    %102 = arith.truncf %101 : vector<4x16xf32> to vector<4x16xbf16>
    %c0_40 = arith.constant 0 : index
    %c0_41 = arith.constant 0 : index
    %103 = vector.load %arg6[%c0_40, %c0_41] : memref<32x4xbf16, #tpu.memory_space<vmem>>, vector<32x4xbf16>
    %c0_42 = arith.constant 0 : index
    %c0_43 = arith.constant 0 : index
    %104 = vector.load %arg7[%c0_42, %c0_43] : memref<32x4xbf16, #tpu.memory_space<vmem>>, vector<32x4xbf16>
    %c0_44 = arith.constant 0 : index
    %c0_45 = arith.constant 0 : index
    %105 = vector.load %arg8[%c0_44, %c0_45] : memref<32x1xf32, #tpu.memory_space<vmem>>, vector<32x1xf32>
    %cst_46 = arith.constant dense<0.000000e+00> : vector<32x16xf32>
    %106 = tpu.matmul %103, %7, %cst_46 {dimension_numbers = #tpu.dot_dimension_numbers<[1], [0], [0], [1], [0, 0, 1, 1], [], []>} : vector<32x4xbf16>, vector<4x16xbf16>, vector<32x16xf32> -> vector<32x16xf32>
    %cst_47 = arith.constant dense<0.000000e+00> : vector<32x16xf32>
    %107 = tpu.matmul %104, %102, %cst_47 {dimension_numbers = #tpu.dot_dimension_numbers<[1], [0], [0], [1], [0, 0, 1, 1], [], []>} : vector<32x4xbf16>, vector<4x16xbf16>, vector<32x16xf32> -> vector<32x16xf32>
    %108 = arith.addf %106, %107 : vector<32x16xf32>
    %109 = vector.broadcast %105 : vector<32x1xf32> to vector<32x16xf32>
    %110 = arith.addf %108, %109 : vector<32x16xf32>
    %cst_48 = arith.constant 0.000000e+00 : f32
    %111 = vector.broadcast %cst_48 : f32 to vector<32x16xf32>
    %112 = arith.maximumf %110, %111 : vector<32x16xf32>
    %c0_49 = arith.constant 0 : index
    %c0_50 = arith.constant 0 : index
    %113 = vector.load %arg9[%c0_49, %c0_50] : memref<16x32xbf16, #tpu.memory_space<vmem>>, vector<16x32xbf16>
    %c0_51 = arith.constant 0 : index
    %c0_52 = arith.constant 0 : index
    %114 = vector.load %arg10[%c0_51, %c0_52] : memref<16x1xf32, #tpu.memory_space<vmem>>, vector<16x1xf32>
    %115 = arith.truncf %112 : vector<32x16xf32> to vector<32x16xbf16>
    %cst_53 = arith.constant dense<0.000000e+00> : vector<16x16xf32>
    %116 = tpu.matmul %113, %115, %cst_53 {dimension_numbers = #tpu.dot_dimension_numbers<[1], [0], [0], [1], [0, 0, 1, 1], [], []>} : vector<16x32xbf16>, vector<32x16xbf16>, vector<16x16xf32> -> vector<16x16xf32>
    %117 = vector.broadcast %114 : vector<16x1xf32> to vector<16x16xf32>
    %118 = arith.addf %116, %117 : vector<16x16xf32>
    %cst_54 = arith.constant 0.000000e+00 : f32
    %119 = vector.broadcast %cst_54 : f32 to vector<16x16xf32>
    %120 = arith.maximumf %118, %119 : vector<16x16xf32>
    %c0_55 = arith.constant 0 : index
    %c0_56 = arith.constant 0 : index
    %c0_57 = arith.constant 0 : index
    %121 = vector.load %arg11[%c0_55, %c0_56, %c0_57] : memref<1x16x16xf32, #tpu.memory_space<vmem>>, vector<1x16x16xf32>
    %122 = vector.shape_cast %121 : vector<1x16x16xf32> to vector<16x16xf32>
    %123 = vector.shape_cast %120 : vector<16x16xf32> to vector<1x16x16xf32>
    tpu.vector_store %arg11[%c0_55, %c0_56, %c0_57], %123 {strides = array<i32>} : memref<1x16x16xf32, #tpu.memory_space<vmem>>, vector<1x16x16xf32>,
    return
  }
  func.func @transform_0(%arg0: i32, %arg1: i32) -> (i32, i32, i32) {
    %c0_i32 = arith.constant 0 : i32
    %c0_i32_0 = arith.constant 0 : i32
    return %arg0, %c0_i32, %arg1 : i32, i32, i32
  }
  func.func @transform_1(%arg0: i32, %arg1: i32) -> (i32, i32, i32) {
    %c0_i32 = arith.constant 0 : i32
    %c0_i32_0 = arith.constant 0 : i32
    %c0_i32_1 = arith.constant 0 : i32
    return %arg0, %c0_i32, %c0_i32_0 : i32, i32, i32
  }
  func.func @transform_2(%arg0: i32, %arg1: i32) -> (i32, i32, i32) {
    %c0_i32 = arith.constant 0 : i32
    %c0_i32_0 = arith.constant 0 : i32
    %c0_i32_1 = arith.constant 0 : i32
    return %arg0, %c0_i32, %c0_i32_0 : i32, i32, i32
  }
  func.func @transform_3(%arg0: i32, %arg1: i32) -> (i32, i32, i32) {
    %c0_i32 = arith.constant 0 : i32
    %c0_i32_0 = arith.constant 0 : i32
    return %arg0, %c0_i32, %arg1 : i32, i32, i32
  }
  func.func @transform_4(%arg0: i32, %arg1: i32) -> (i32, i32) {
    %c0_i32 = arith.constant 0 : i32
    %c0_i32_0 = arith.constant 0 : i32
    %c0_i32_1 = arith.constant 0 : i32
    return %c0_i32, %c0_i32_0 : i32, i32
  }
  func.func @transform_5(%arg0: i32, %arg1: i32) -> (i32, i32) {
    %c0_i32 = arith.constant 0 : i32
    %c0_i32_0 = arith.constant 0 : i32
    %c0_i32_1 = arith.constant 0 : i32
    return %c0_i32, %c0_i32_0 : i32, i32
  }
  func.func @transform_6(%arg0: i32, %arg1: i32) -> (i32, i32) {
    %c0_i32 = arith.constant 0 : i32
    %c0_i32_0 = arith.constant 0 : i32
    %c0_i32_1 = arith.constant 0 : i32
    return %c0_i32, %c0_i32_0 : i32, i32
  }
  func.func @transform_7(%arg0: i32, %arg1: i32) -> (i32, i32) {
    %c0_i32 = arith.constant 0 : i32
    %c0_i32_0 = arith.constant 0 : i32
    %c0_i32_1 = arith.constant 0 : i32
    return %c0_i32, %c0_i32_0 : i32, i32
  }
  func.func @transform_8(%arg0: i32, %arg1: i32) -> (i32, i32) {
    %c0_i32 = arith.constant 0 : i32
    %c0_i32_0 = arith.constant 0 : i32
    %c0_i32_1 = arith.constant 0 : i32
    return %c0_i32, %c0_i32_0 : i32, i32
  }
  func.func @transform_9(%arg0: i32, %arg1: i32) -> (i32, i32, i32) {
    %c0_i32 = arith.constant 0 : i32
    %c0_i32_0 = arith.constant 0 : i32
    return %arg0, %c0_i32, %arg1 : i32, i32, i32
  }
}

</mosaic_0001>

<llo_original>
// kernel: tpu_custom_call.1
$region0: #{tpu_custom_call.1}
  #allocation0 [shape = 'u32[]', space=smem, size = 0x4, offset = 0x4, fixed_abs, tag = 'smem constant byte address 0x4 - core index']
  #allocation1 [shape = 'u32[144,128]{1,0:T(1,128)}', space=vmem, size = 0x12000, scoped, tag = 'internal scratch']
  %s0 = inlined_call_operand.vmem [shape: f32[2,3,16], index: 0, kind: input, shape index: {}]
  %s1 = inlined_call_operand.vmem [shape: f32[2,3,8], index: 1, kind: input, shape index: {}]
  %s2 = inlined_call_operand.vmem [shape: bf16[2,4,8], index: 2, kind: input, shape index: {}]
  %s3 = inlined_call_operand.vmem [shape: bf16[2,4,16], index: 3, kind: input, shape index: {}]
  %s4 = inlined_call_operand.vmem [shape: bf16[32,4], index: 4, kind: input, shape index: {}]
  %s5 = inlined_call_operand.vmem [shape: bf16[32,4], index: 5, kind: input, shape index: {}]
  %s6 = inlined_call_operand.vmem [shape: f32[32,1], index: 6, kind: input, shape index: {}]
  %s7 = inlined_call_operand.vmem [shape: bf16[16,32], index: 7, kind: input, shape index: {}]
  %s8 = inlined_call_operand.vmem [shape: f32[16,1], index: 8, kind: input, shape index: {}]
  %s9 = inlined_call_operand.hbm [shape: f32[2,16,16], index: 9, kind: output, shape index: {}]
  %s10 = sld [smem:[#allocation0]]
  $region69: #{tpu_custom_call.1} parent=0
    _
  %s12 = ssub.s32 1, %s10
  %s13 = scalar_select 0, %s12, %s10
  $region1: #{tpu_custom_call.1} parent=0
    #allocation2 [shape = 'u8[16384]{0}', space=vmem, size = 0x4000, scoped, tag = 'output window, operand 0']
    #allocation3 [shape = 's32[2]{0}', space=sflag, size = 0x8, scoped, tag = 'scoped memory for tpu_custom_call.1']
    %14 = vsyncpa [#allocation3], 0
    %s15 = scalar_lea.sflag [#allocation3], 1
    %16 = vsyncpa %s15, 0
    loop: start=0, step=1, limit=4
    $region2: #{tpu_custom_call.1} parent=1 // loop_pre_header
      _
    $region3: #{tpu_custom_call.1} parent=1 // loop_header
      %s18 = sphi 0, %s22
      %p19 = scmp.ge.s32.totalorder %s18, 4
      %s25 = sphi 0, %s37
      %s26 = sphi 0, %s33
      %s27 = sphi 0, %s25
      %s28 = sphi 0, %s26
      %s29 = sphi 0, %s27
      %s30 = sphi 0, %s28
      %s42 = sphi 0, %s44
      %s45 = sphi 0, %s42
      %s46 = sphi 0, %s45
      %s62 = sphi 0, %s46
      %s68 = sphi 0, %s70
      %s71 = sphi 0, %s68
      %s72 = sphi 0, %s71
      %s88 = sphi 0, %s72
      %s94 = sphi 0, %s96
      %s97 = sphi 0, %s94
      %s98 = sphi 0, %s97
      %s114 = sphi 0, %s98
      %s122 = sphi 0, %s124
      %s125 = sphi 0, %s122
      %s126 = sphi 0, %s125
      %s142 = sphi 0, %s126
      %s146 = sphi 0, %s146
      %s148 = sphi 0, %s146
      %s149 = sphi 0, %s148
      %s163 = sphi 0, %s149
      %s167 = sphi 0, %s167
      %s169 = sphi 0, %s167
      %s170 = sphi 0, %s169
      %s184 = sphi 0, %s170
      %s188 = sphi 0, %s188
      %s190 = sphi 0, %s188
      %s191 = sphi 0, %s190
      %s205 = sphi 0, %s191
      %s209 = sphi 0, %s209
      %s211 = sphi 0, %s209
      %s212 = sphi 0, %s211
      %s226 = sphi 0, %s212
      %s230 = sphi 0, %s230
      %s232 = sphi 0, %s230
      %s233 = sphi 0, %s232
      %s247 = sphi 0, %s233
      %s255 = sphi 0, %s257
      %s258 = sphi 0, %s255
      %s259 = sphi 0, %s258
      %s275 = sphi 0, %s259
    $region4: #{tpu_custom_call.1} parent=1 // loop_header_branch
      %21 = sbr.rel (%p19) target = $region8
    $region5: #{tpu_custom_call.1} parent=1 // loop_body
      %s23 = ssub.s32 %s18, 1
      %s24 = ssub.s32 %s18, 2
      %s31 = sadd.s32 1, %s26
      %p32 = scmp.ge.s32.totalorder %s31, 1
      %s33 = scalar_select %p32, 0, %s31
      %s34 = sadd.s32 1, %s25
      %s35 = scalar_select %p32, %s34, %s25
      %p36 = scmp.ge.s32.totalorder %s35, 2
      %s37 = scalar_select %p36, 0, %s35
      %s38 = ssub.s32 %s25, %s37
      %s39 = ssub.s32 %s26, %s33
      %s40 = sor.u32 %s38, %s39
      %p41 = scmp.eq.s32.totalorder %s40, 0
      %s43 = sadd.s32 %s42, 1
      %s44 = scalar_select %p41, %s42, %s43
      %p47 = pneg %p41
      %p48 = scmp.eq.s32.totalorder %s18, 1
      %p49 = por %p47, %p48
      %p50 = scmp.ne.s32.totalorder %s42, %s45
      %p51 = scmp.eq.s32.totalorder %s18, 0
      %p52 = por %p50, %p51
      %p53 = scmp.ne.s32.totalorder %s42, %s45
      %p54 = scmp.eq.s32.totalorder %s23, 1
      %p55 = por %p53, %p54
      %p56 = scmp.ne.s32.totalorder %s45, %s46
      %p57 = scmp.eq.s32.totalorder %s23, 0
      %p58 = por %p56, %p57
      %p59 = scmp.ne.s32.totalorder %s45, %s46
      %p60 = scmp.eq.s32.totalorder %s24, 1
      %p61 = por %p59, %p60
      %p63 = scmp.ne.s32.totalorder %s46, %s62
      %p64 = scmp.eq.s32.totalorder %s24, 0
      %p65 = por %p63, %p64
      %s66 = ssub.s32 %s25, %s37
      %p67 = scmp.eq.s32.totalorder %s66, 0
      %s69 = sadd.s32 %s68, 1
      %s70 = scalar_select %p67, %s68, %s69
      %p73 = pneg %p67
      %p74 = scmp.eq.s32.totalorder %s18, 1
      %p75 = por %p73, %p74
      %p76 = scmp.ne.s32.totalorder %s68, %s71
      %p77 = scmp.eq.s32.totalorder %s18, 0
      %p78 = por %p76, %p77
      %p79 = scmp.ne.s32.totalorder %s68, %s71
      %p80 = scmp.eq.s32.totalorder %s23, 1
      %p81 = por %p79, %p80
      %p82 = scmp.ne.s32.totalorder %s71, %s72
      %p83 = scmp.eq.s32.totalorder %s23, 0
      %p84 = por %p82, %p83
      %p85 = scmp.ne.s32.totalorder %s71, %s72
      %p86 = scmp.eq.s32.totalorder %s24, 1
      %p87 = por %p85, %p86
      %p89 = scmp.ne.s32.totalorder %s72, %s88
      %p90 = scmp.eq.s32.totalorder %s24, 0
      %p91 = por %p89, %p90
      %s92 = ssub.s32 %s25, %s37
      %p93 = scmp.eq.s32.totalorder %s92, 0
      %s95 = sadd.s32 %s94, 1
      %s96 = scalar_select %p93, %s94, %s95
      %p99 = pneg %p93
      %p100 = scmp.eq.s32.totalorder %s18, 1
      %p101 = por %p99, %p100
      %p102 = scmp.ne.s32.totalorder %s94, %s97
      %p103 = scmp.eq.s32.totalorder %s18, 0
      %p104 = por %p102, %p103
      %p105 = scmp.ne.s32.totalorder %s94, %s97
      %p106 = scmp.eq.s32.totalorder %s23, 1
      %p107 = por %p105, %p106
      %p108 = scmp.ne.s32.totalorder %s97, %s98
      %p109 = scmp.eq.s32.totalorder %s23, 0
      %p110 = por %p108, %p109
      %p111 = scmp.ne.s32.totalorder %s97, %s98
      %p112 = scmp.eq.s32.totalorder %s24, 1
      %p113 = por %p111, %p112
      %p115 = scmp.ne.s32.totalorder %s98, %s114
      %p116 = scmp.eq.s32.totalorder %s24, 0
      %p117 = por %p115, %p116
      %s118 = ssub.s32 %s25, %s37
      %s119 = ssub.s32 %s26, %s33
      %s120 = sor.u32 %s118, %s119
      %p121 = scmp.eq.s32.totalorder %s120, 0
      %s123 = sadd.s32 %s122, 1
      %s124 = scalar_select %p121, %s122, %s123
      %p127 = pneg %p121
      %p128 = scmp.eq.s32.totalorder %s18, 1
      %p129 = por %p127, %p128
      %p130 = scmp.ne.s32.totalorder %s122, %s125
      %p131 = scmp.eq.s32.totalorder %s18, 0
      %p132 = por %p130, %p131
      %p133 = scmp.ne.s32.totalorder %s122, %s125
      %p134 = scmp.eq.s32.totalorder %s23, 1
      %p135 = por %p133, %p134
      %p136 = scmp.ne.s32.totalorder %s125, %s126
      %p137 = scmp.eq.s32.totalorder %s23, 0
      %p138 = por %p136, %p137
      %p139 = scmp.ne.s32.totalorder %s125, %s126
      %p140 = scmp.eq.s32.totalorder %s24, 1
      %p141 = por %p139, %p140
      %p143 = scmp.ne.s32.totalorder %s126, %s142
      %p144 = scmp.eq.s32.totalorder %s24, 0
      %p145 = por %p143, %p144
      %s147 = sadd.s32 %s146, 1
      %p150 = scmp.eq.s32.totalorder %s18, 1
      %p151 = scmp.ne.s32.totalorder %s146, %s148
      %p152 = scmp.eq.s32.totalorder %s18, 0
      %p153 = por %p151, %p152
      %p154 = scmp.ne.s32.totalorder %s146, %s148
      %p155 = scmp.eq.s32.totalorder %s23, 1
      %p156 = por %p154, %p155
      %p157 = scmp.ne.s32.totalorder %s148, %s149
      %p158 = scmp.eq.s32.totalorder %s23, 0
      %p159 = por %p157, %p158
      %p160 = scmp.ne.s32.totalorder %s148, %s149
      %p161 = scmp.eq.s32.totalorder %s24, 1
      %p162 = por %p160, %p161
      %p164 = scmp.ne.s32.totalorder %s149, %s163
      %p165 = scmp.eq.s32.totalorder %s24, 0
      %p166 = por %p164, %p165
      %s168 = sadd.s32 %s167, 1
      %p171 = scmp.eq.s32.totalorder %s18, 1
      %p172 = scmp.ne.s32.totalorder %s167, %s169
      %p173 = scmp.eq.s32.totalorder %s18, 0
      %p174 = por %p172, %p173
      %p175 = scmp.ne.s32.totalorder %s167, %s169
      %p176 = scmp.eq.s32.totalorder %s23, 1
      %p177 = por %p175, %p176
      %p178 = scmp.ne.s32.totalorder %s169, %s170
      %p179 = scmp.eq.s32.totalorder %s23, 0
      %p180 = por %p178, %p179
      %p181 = scmp.ne.s32.totalorder %s169, %s170
      %p182 = scmp.eq.s32.totalorder %s24, 1
      %p183 = por %p181, %p182
      %p185 = scmp.ne.s32.totalorder %s170, %s184
      %p186 = scmp.eq.s32.totalorder %s24, 0
      %p187 = por %p185, %p186
      %s189 = sadd.s32 %s188, 1
      %p192 = scmp.eq.s32.totalorder %s18, 1
      %p193 = scmp.ne.s32.totalorder %s188, %s190
      %p194 = scmp.eq.s32.totalorder %s18, 0
      %p195 = por %p193, %p194
      %p196 = scmp.ne.s32.totalorder %s188, %s190
      %p197 = scmp.eq.s32.totalorder %s23, 1
      %p198 = por %p196, %p197
      %p199 = scmp.ne.s32.totalorder %s190, %s191
      %p200 = scmp.eq.s32.totalorder %s23, 0
      %p201 = por %p199, %p200
      %p202 = scmp.ne.s32.totalorder %s190, %s191
      %p203 = scmp.eq.s32.totalorder %s24, 1
      %p204 = por %p202, %p203
      %p206 = scmp.ne.s32.totalorder %s191, %s205
      %p207 = scmp.eq.s32.totalorder %s24, 0
      %p208 = por %p206, %p207
      %s210 = sadd.s32 %s209, 1
      %p213 = scmp.eq.s32.totalorder %s18, 1
      %p214 = scmp.ne.s32.totalorder %s209, %s211
      %p215 = scmp.eq.s32.totalorder %s18, 0
      %p216 = por %p214, %p215
      %p217 = scmp.ne.s32.totalorder %s209, %s211
      %p218 = scmp.eq.s32.totalorder %s23, 1
      %p219 = por %p217, %p218
      %p220 = scmp.ne.s32.totalorder %s211, %s212
      %p221 = scmp.eq.s32.totalorder %s23, 0
      %p222 = por %p220, %p221
      %p223 = scmp.ne.s32.totalorder %s211, %s212
      %p224 = scmp.eq.s32.totalorder %s24, 1
      %p225 = por %p223, %p224
      %p227 = scmp.ne.s32.totalorder %s212, %s226
      %p228 = scmp.eq.s32.totalorder %s24, 0
      %p229 = por %p227, %p228
      %s231 = sadd.s32 %s230, 1
      %p234 = scmp.eq.s32.totalorder %s18, 1
      %p235 = scmp.ne.s32.totalorder %s230, %s232
      %p236 = scmp.eq.s32.totalorder %s18, 0
      %p237 = por %p235, %p236
      %p238 = scmp.ne.s32.totalorder %s230, %s232
      %p239 = scmp.eq.s32.totalorder %s23, 1
      %p240 = por %p238, %p239
      %p241 = scmp.ne.s32.totalorder %s232, %s233
      %p242 = scmp.eq.s32.totalorder %s23, 0
      %p243 = por %p241, %p242
      %p244 = scmp.ne.s32.totalorder %s232, %s233
      %p245 = scmp.eq.s32.totalorder %s24, 1
      %p246 = por %p244, %p245
      %p248 = scmp.ne.s32.totalorder %s233, %s247
      %p249 = scmp.eq.s32.totalorder %s24, 0
      %p250 = por %p248, %p249
      %s251 = ssub.s32 %s25, %s37
      %s252 = ssub.s32 %s26, %s33
      %s253 = sor.u32 %s251, %s252
      %p254 = scmp.eq.s32.totalorder %s253, 0
      %s256 = sadd.s32 %s255, 1
      %s257 = scalar_select %p254, %s255, %s256
      %p260 = pneg %p254
      %p261 = scmp.eq.s32.totalorder %s18, 1
      %p262 = por %p260, %p261
      %p263 = scmp.ne.s32.totalorder %s255, %s258
      %p264 = scmp.eq.s32.totalorder %s18, 0
      %p265 = por %p263, %p264
      %p266 = scmp.ne.s32.totalorder %s255, %s258
      %p267 = scmp.eq.s32.totalorder %s23, 1
      %p268 = por %p266, %p267
      %p269 = scmp.ne.s32.totalorder %s258, %s259
      %p270 = scmp.eq.s32.totalorder %s23, 0
      %p271 = por %p269, %p270
      %p272 = scmp.ne.s32.totalorder %s258, %s259
      %p273 = scmp.eq.s32.totalorder %s24, 1
      %p274 = por %p272, %p273
      %p276 = scmp.ne.s32.totalorder %s259, %s275
      %p277 = scmp.eq.s32.totalorder %s24, 0
      %p278 = por %p276, %p277
      %p279 = scmp.le.s32.totalorder 1, %s18
      %p280 = scmp.lt.s32.totalorder %s18, 3
      %p281 = pnand %p279, %p280
      %p282 = pneg %p281
      // Predicated region
      $region9: #{tpu_custom_call.1} parent=5 // pred_check
        _
      $region10: #{tpu_custom_call.1} parent=5 // pred_check_branch
        %284 = sbr.rel (%p281) target = $region12
      $region11: #{tpu_custom_call.1} parent=5 // pred_region
        %s285 = ssub.s32 %s18, 1
        // Predicated region
        $region13: #{tpu_custom_call.1} parent=11 // pred_check
          %p286 = pneg %p84
        $region14: #{tpu_custom_call.1} parent=11 // pred_check_branch
          %288 = sbr.rel (%p286) target = $region16
        $region15: #{tpu_custom_call.1} parent=11 // pred_region
          %p289 = scmp.lt.s32.totalorder %s27, 1
          %s290 = scalar_select %p289, %s27, 1
          %s291 = smul.addr %s290, 4
          %s292 = scalar_lea.vmem %s1, %s291
        $region16: #{tpu_custom_call.1} parent=11 // pred_fallthru
          _
        // Predicated region
        $region17: #{tpu_custom_call.1} parent=11 // pred_check
          %p293 = pneg %p110
        $region18: #{tpu_custom_call.1} parent=11 // pred_check_branch
          %295 = sbr.rel (%p293) target = $region20
        $region19: #{tpu_custom_call.1} parent=11 // pred_region
          %p296 = scmp.lt.s32.totalorder %s27, 1
          %s297 = scalar_select %p296, %s27, 1
          %s298 = smul.addr %s297, 2
          %s299 = scalar_lea.vmem %s2, %s298
        $region20: #{tpu_custom_call.1} parent=11 // pred_fallthru
          _
        // Predicated region
        $region21: #{tpu_custom_call.1} parent=11 // pred_check
          %p300 = pneg %p159
        $region22: #{tpu_custom_call.1} parent=11 // pred_check_branch
          %302 = sbr.rel (%p300) target = $region24
        $region23: #{tpu_custom_call.1} parent=11 // pred_region
          _
        $region24: #{tpu_custom_call.1} parent=11 // pred_fallthru
          _
        // Predicated region
        $region25: #{tpu_custom_call.1} parent=11 // pred_check
          %p303 = pneg %p180
        $region26: #{tpu_custom_call.1} parent=11 // pred_check_branch
          %305 = sbr.rel (%p303) target = $region28
        $region27: #{tpu_custom_call.1} parent=11 // pred_region
          _
        $region28: #{tpu_custom_call.1} parent=11 // pred_fallthru
          _
        // Predicated region
        $region29: #{tpu_custom_call.1} parent=11 // pred_check
          %p306 = pneg %p201
        $region30: #{tpu_custom_call.1} parent=11 // pred_check_branch
          %308 = sbr.rel (%p306) target = $region32
        $region31: #{tpu_custom_call.1} parent=11 // pred_region
          _
        $region32: #{tpu_custom_call.1} parent=11 // pred_fallthru
          _
        // Predicated region
        $region33: #{tpu_custom_call.1} parent=11 // pred_check
          %p309 = pneg %p222
        $region34: #{tpu_custom_call.1} parent=11 // pred_check_branch
          %311 = sbr.rel (%p309) target = $region36
        $region35: #{tpu_custom_call.1} parent=11 // pred_region
          _
        $region36: #{tpu_custom_call.1} parent=11 // pred_fallthru
          _
        // Predicated region
        $region37: #{tpu_custom_call.1} parent=11 // pred_check
          %p312 = pneg %p243
        $region38: #{tpu_custom_call.1} parent=11 // pred_check_branch
          %314 = sbr.rel (%p312) target = $region40
        $region39: #{tpu_custom_call.1} parent=11 // pred_region
          _
        $region40: #{tpu_custom_call.1} parent=11 // pred_fallthru
          _
      $region12: #{tpu_custom_call.1} parent=5 // pred_fallthru
        _
      %p315 = scmp.lt.s32.totalorder %s18, 2
      // Predicated region
      $region41: #{tpu_custom_call.1} parent=5 // pred_check
        %p316 = pneg %p315
      $region42: #{tpu_custom_call.1} parent=5 // pred_check_branch
        %318 = sbr.rel (%p316) target = $region44
      $region43: #{tpu_custom_call.1} parent=5 // pred_region
        // Predicated region
        $region45: #{tpu_custom_call.1} parent=43 // pred_check
          %p319 = pneg %p52
        $region46: #{tpu_custom_call.1} parent=43 // pred_check_branch
          %321 = sbr.rel (%p319) target = $region48
        $region47: #{tpu_custom_call.1} parent=43 // pred_region
          %p322 = scmp.lt.s32.totalorder %s25, 1
          %s323 = scalar_select %p322, %s25, 1
          %p324 = scmp.lt.s32.totalorder %s26, 0
          %s325 = scalar_select %p324, %s26, 0
          %s326 = sadd.s32 %s325, %s323
          %s327 = smul.addr %s326, 4
          %s328 = scalar_lea.vmem %s0, %s327
        $region48: #{tpu_custom_call.1} parent=43 // pred_fallthru
          _
        // Predicated region
        $region49: #{tpu_custom_call.1} parent=43 // pred_check
          %p329 = pneg %p132
        $region50: #{tpu_custom_call.1} parent=43 // pred_check_branch
          %331 = sbr.rel (%p329) target = $region52
        $region51: #{tpu_custom_call.1} parent=43 // pred_region
          %p332 = scmp.lt.s32.totalorder %s25, 1
          %s333 = scalar_select %p332, %s25, 1
          %p334 = scmp.lt.s32.totalorder %s26, 0
          %s335 = scalar_select %p334, %s26, 0
          %s336 = sadd.s32 %s335, %s333
          %s337 = smul.addr %s336, 2
          %s338 = scalar_lea.vmem %s3, %s337
        $region52: #{tpu_custom_call.1} parent=43 // pred_fallthru
          _
      $region44: #{tpu_custom_call.1} parent=5 // pred_fallthru
        _
      %p339 = scmp.le.s32.totalorder 1, %s18
      %p340 = scmp.lt.s32.totalorder %s18, 3
      %p341 = pnand %p339, %p340
      %p342 = pneg %p341
      // Predicated region
      $region53: #{tpu_custom_call.1} parent=5 // pred_check
        _
      $region54: #{tpu_custom_call.1} parent=5 // pred_check_branch
        %344 = sbr.rel (%p341) target = $region56
      $region55: #{tpu_custom_call.1} parent=5 // pred_region
        %s345 = ssub.s32 %s18, 1
        %p346 = scmp.lt.s32.totalorder %s27, 1
        %s347 = scalar_select %p346, %s27, 1
        %p348 = scmp.lt.s32.totalorder %s28, 0
        %s349 = scalar_select %p348, %s28, 0
        %s350 = sadd.s32 %s349, %s347
        %s351 = smul.addr %s350, 4
        %s352 = scalar_lea.vmem %s0, %s351
        %p353 = pneg %p58
        %p354 = pneg %p55
        %p355 = scmp.lt.s32.totalorder %s27, 1
        %s356 = scalar_select %p355, %s27, 1
        %s357 = smul.addr %s356, 4
        %s358 = scalar_lea.vmem %s1, %s357
        %p359 = pneg %p84
        %p360 = pneg %p81
        %p361 = scmp.lt.s32.totalorder %s27, 1
        %s362 = scalar_select %p361, %s27, 1
        %s363 = smul.addr %s362, 2
        %s364 = scalar_lea.vmem %s2, %s363
        %p365 = pneg %p110
        %p366 = pneg %p107
        %p367 = scmp.lt.s32.totalorder %s27, 1
        %s368 = scalar_select %p367, %s27, 1
        %p369 = scmp.lt.s32.totalorder %s28, 0
        %s370 = scalar_select %p369, %s28, 0
        %s371 = sadd.s32 %s370, %s368
        %s372 = smul.addr %s371, 2
        %s373 = scalar_lea.vmem %s3, %s372
        %p374 = pneg %p138
        %p375 = pneg %p135
        %p376 = pneg %p159
        %p377 = pneg %p156
        %p378 = pneg %p180
        %p379 = pneg %p177
        %p380 = pneg %p201
        %p381 = pneg %p198
        %p382 = pneg %p222
        %p383 = pneg %p219
        %p384 = pneg %p243
        %p385 = pneg %p240
        %p386 = pneg %p271
        %p387 = pneg %p268
        %s388 = sand.u32 %s258, 1
        %s389 = scalar_lea.sflag [#allocation3], %s388
        %s390 = sand.u32 %s258, 1
        %s391 = smul.addr %s390, 16
        %s392 = scalar_lea.vmem [#allocation2], %s391
        %p393 = scmp.lt.s32.totalorder %s27, 1
        %s394 = scalar_select %p393, %s27, 1
        %p395 = scmp.lt.s32.totalorder %s28, 0
        %s396 = scalar_select %p395, %s28, 0
        %s397 = sadd.s32 %s396, %s394
        %s398 = smul.addr %s397, 4
        %s399 = scalar_lea.vmem %s0, %s398
        %p400 = scmp.lt.s32.totalorder %s27, 1
        %s401 = scalar_select %p400, %s27, 1
        %s402 = smul.addr %s401, 4
        %s403 = scalar_lea.vmem %s1, %s402
        %p404 = scmp.lt.s32.totalorder %s27, 1
        %s405 = scalar_select %p404, %s27, 1
        %s406 = smul.addr %s405, 2
        %s407 = scalar_lea.vmem %s2, %s406
        %p408 = scmp.lt.s32.totalorder %s27, 1
        %s409 = scalar_select %p408, %s27, 1
        %p410 = scmp.lt.s32.totalorder %s28, 0
        %s411 = scalar_select %p410, %s28, 0
        %s412 = sadd.s32 %s411, %s409
        %s413 = smul.addr %s412, 2
        %s414 = scalar_lea.vmem %s3, %s413
        %v416 = vld [vmem:[%s399] sm:$0x7]
        %v417 = vld [vmem:[%s403] sm:$0x7]
        %v418 = vld [vmem:[%s407] sm:$0x3]
        %v419 = vld [vmem:[%s414] sm:$0x3]
        %420 = vxpose.xlu0.b32.start [1/16] %v416, 128
        %421 = vxpose.xlu0.b32.cont [2/16] 0.0, 128
        %422 = vxpose.xlu0.b32.cont [3/16] 0.0, 128
        %423 = vxpose.xlu0.b32.cont [4/16] 0.0, 128
        %424 = vxpose.xlu0.b32.cont [5/16] 0.0, 128
        %425 = vxpose.xlu0.b32.cont [6/16] 0.0, 128
        %426 = vxpose.xlu0.b32.cont [7/16] 0.0, 128
        %427 = vxpose.xlu0.b32.cont [8/16] 0.0, 128
        %428 = vxpose.xlu0.b32.cont [9/16] 0.0, 128
        %429 = vxpose.xlu0.b32.cont [10/16] 0.0, 128
        %430 = vxpose.xlu0.b32.cont [11/16] 0.0, 128
        %431 = vxpose.xlu0.b32.cont [12/16] 0.0, 128
        %432 = vxpose.xlu0.b32.cont [13/16] 0.0, 128
        %433 = vxpose.xlu0.b32.cont [14/16] 0.0, 128
        %434 = vxpose.xlu0.b32.cont [15/16] 0.0, 128
        %435 = vxpose.xlu0.b32.end [16/16] 0.0, 128
        %v436 = vpop.trf.xlu0
        %v437 = vpop.trf.xlu0
        %v438 = vpop.trf.xlu0
        %v439 = vpop.trf.xlu0
        %v440 = vpop.trf.xlu0
        %v441 = vpop.trf.xlu0
        %v442 = vpop.trf.xlu0
        %v443 = vpop.trf.xlu0
        %v444 = vpop.trf.xlu0
        %v445 = vpop.trf.xlu0
        %v446 = vpop.trf.xlu0
        %v447 = vpop.trf.xlu0
        %v448 = vpop.trf.xlu0
        %v449 = vpop.trf.xlu0
        %v450 = vpop.trf.xlu0
        %v451 = vpop.trf.xlu0
        %v452 = vmul.f32 %v436, %v436
        %v453 = vmul.f32 %v437, %v437
        %vm454 = vcmask 23552
        %v455 = vsel %vm454, %v452, 0.0
        %456 = vadd.xlane.f32.xlu0 %v455
        %v457 = vpop.xlane.xlu0 %456
        %v458 = vsel %vm454, %v453, 0.0
        %459 = vadd.xlane.f32.xlu0 %v458
        %v460 = vpop.xlane.xlu0 %459
        %v461 = vmul.f32 %v417, %v417
        %vm462 = vcmask 59392
        %v463 = vsel %vm462, %v461, 0.0
        %v464 = vrot.slane %v463, 4
        %v465 = vadd.f32 %v463, %v464
        %v466 = vrot.slane %v465, 2
        %v467 = vadd.f32 %v465, %v466
        %v468 = vrot.slane %v467, 1
        %v469 = vadd.f32 %v467, %v468
        %v471 = vsel %vm454, %v436, 0
        %v474 = vsel %vm454, %v437, 0
        %vm476 = vcmask 1042432
        %v478 = vsel %vm476, %v417, 0
        %480 = vmatprep.subr.mxu0 0.0
        %481 = vmatpush1.msra.mxu0 %v478
        %482 = vmatprep.subr.mxu0 0.0
        %483 = vmatpush1.msra.mxu0 0.0
        %484 = vmatprep.subr.mxu0 0.0
        %485 = vmatpush1.msra.mxu0 0.0
        %486 = vmatprep.subr.mxu0 0.0
        %487 = vmatpush1.msra.mxu0 0.0
        %488 = vmatprep.subr.mxu0 0.0
        %489 = vmatpush1.msra.mxu0 0.0
        %490 = vmatprep.subr.mxu0 0.0
        %491 = vmatpush1.msra.mxu0 0.0
        %492 = vmatprep.subr.mxu0 0.0
        %493 = vmatpush1.msra.mxu0 0.0
        %494 = vmatprep.subr.mxu0 0.0
        %495 = vmatpush1.msra.mxu0 0.0
        %496 = vmatprep.subr.mxu0 0.0
        %497 = vmatpush1.msra.mxu0 0.0
        %498 = vmatprep.subr.mxu0 0.0
        %499 = vmatpush1.msra.mxu0 0.0
        %500 = vmatprep.subr.mxu0 0.0
        %501 = vmatpush1.msra.mxu0 0.0
        %502 = vmatprep.subr.mxu0 0.0
        %503 = vmatpush1.msra.mxu0 0.0
        %504 = vmatprep.subr.mxu0 0.0
        %505 = vmatpush1.msra.mxu0 0.0
        %506 = vmatprep.subr.mxu0 0.0
        %507 = vmatpush1.msra.mxu0 0.0
        %508 = vmatprep.subr.mxu0 0.0
        %509 = vmatpush1.msra.mxu0 0.0
        %510 = vmatprep.subr.mxu0 0.0
        %511 = vmatpush1.msra.mxu0 0.0
        %512 = vmatprep.subr.mxu0 0.0
        %513 = vmatpush1.msra.mxu0 0.0
        %514 = vmatprep.subr.mxu0 0.0
        %515 = vmatpush1.msra.mxu0 0.0
        %516 = vmatprep.subr.mxu0 0.0
        %517 = vmatpush1.msra.mxu0 0.0
        %518 = vmatprep.subr.mxu0 0.0
        %519 = vmatpush1.msra.mxu0 0.0
        %520 = vmatprep.subr.mxu0 0.0
        %521 = vmatpush1.msra.mxu0 0.0
        %522 = vmatprep.subr.mxu0 0.0
        %523 = vmatpush1.msra.mxu0 0.0
        %524 = vmatprep.subr.mxu0 0.0
        %525 = vmatpush1.msra.mxu0 0.0
        %526 = vmatprep.subr.mxu0 0.0
        %527 = vmatpush1.msra.mxu0 0.0
        %528 = vmatprep.subr.mxu0 0.0
        %529 = vmatpush1.msra.mxu0 0.0
        %530 = vmatprep.subr.mxu0 0.0
        %531 = vmatpush1.msra.mxu0 0.0
        %532 = vmatprep.subr.mxu0 0.0
        %533 = vmatpush1.msra.mxu0 0.0
        %534 = vmatprep.subr.mxu0 0.0
        %535 = vmatpush1.msra.mxu0 0.0
        %536 = vmatprep.subr.mxu0 0.0
        %537 = vmatpush1.msra.mxu0 0.0
        %538 = vmatprep.subr.mxu0 0.0
        %539 = vmatpush1.msra.mxu0 0.0
        %540 = vmatprep.subr.mxu0 0.0
        %541 = vmatpush1.msra.mxu0 0.0
        %542 = vmatprep.subr.mxu0 0.0
        %543 = vmatpush1.msra.mxu0 0.0
        %544 = vmatprep.mubr.f32.mxu0 0.0
        %545 = vmatmul.mubr.f32.gmra.mrb[0].mxu0 %v471
        %v546 = vpop.f32.mrb[0].mxu0
        %v547 = vadd.f32 0.0, %v546
        %v548 = vpop.f32.mrb[0].mxu0
        %549 = vmatprep.mubr.f32.mxu0 0.0
        %550 = vmatmul.mubr.f32.gmra.mrb[0].mxu0 %v474
        %v551 = vpop.f32.mrb[0].mxu0
        %v552 = vadd.f32 0.0, %v551
        %v553 = vpop.f32.mrb[0].mxu0
        %554 = vdwg.mxu0
        %v555 = vmul.f32 %v547, 2.0
        %v556 = vmul.f32 %v552, 2.0
        %v557 = vsub.f32 %v469, %v555
        %v558 = vsub.f32 %v469, %v556
        %v559 = vlaneseq
        %v560 = vand.u32 %v559, 127
        %vm561 = vcmask 64512
        %v562 = vsel %vm561, %v557, inf
        %563 = vmin.xlane.f32.xlu0 %v562
        %v564 = vpop.xlane.xlu0 %563
        %v565 = vsel %vm561, %v558, inf
        %566 = vmin.xlane.f32.xlu0 %v565
        %v567 = vpop.xlane.xlu0 %566
        %vm568 = vcmp.eq.f32.partialorder %v557, %v564
        %vm569 = vcmp.eq.f32.partialorder %v558, %v567
        %v570 = vsel %vm568, %v560, 8
        %v571 = vsel %vm569, %v560, 8
        %v572 = vsel %vm561, %v570, 2147483647
        %v573 = vand.u32 %v572, 65535
        %v574 = vshra.s32 %v572, 16
        %v575 = vcvt.s32.f32 %v573
        %v576 = vcvt.s32.f32 %v574
        %577 = vmin.xlane.f32.xlu0 %v576
        %v578 = vpop.xlane.xlu0 %577
        %vm579 = vcmp.eq.f32.partialorder %v576, %v578
        %v580 = vsel %vm579, %v575, inf
        %581 = vmin.xlane.f32.xlu0 %v580
        %v582 = vpop.xlane.xlu0 %581
        %v583 = vcvt.f32.s32 %v582
        %v584 = vcvt.f32.s32 %v578
        %v585 = vshll.u32 %v584, 16
        %v586 = vadd.s32 %v585, %v583
        %v587 = vsel %vm561, %v571, 2147483647
        %v588 = vand.u32 %v587, 65535
        %v589 = vshra.s32 %v587, 16
        %v590 = vcvt.s32.f32 %v588
        %v591 = vcvt.s32.f32 %v589
        %592 = vmin.xlane.f32.xlu0 %v591
        %v593 = vpop.xlane.xlu0 %592
        %vm594 = vcmp.eq.f32.partialorder %v591, %v593
        %v595 = vsel %vm594, %v590, inf
        %596 = vmin.xlane.f32.xlu0 %v595
        %v597 = vpop.xlane.xlu0 %596
        %v598 = vcvt.f32.s32 %v597
        %v599 = vcvt.f32.s32 %v593
        %v600 = vshll.u32 %v599, 16
        %v601 = vadd.s32 %v600, %v598
        %vm602 = vcmp.eq.s32.totalorder %v560, %v586
        %vm603 = vcmp.eq.s32.totalorder %v560, %v601
        %v604 = vadd.f32 %v564, %v457
        %v605 = vadd.f32 %v567, %v460
        %v606 = vmax.f32 %v604, 0.0
        %v607 = vmax.f32 %v605, 0.0
        %v608 = vadd.f32 %v606, 1e-08
        %v609 = vadd.f32 %v607, 1e-08
        %v610 = vrcp.pop %v608
        %v611 = vmul.f32 1.0, %v610
        %v612 = vrcp.pop %v609
        %v613 = vmul.f32 1.0, %v612
        %v614 = vsel %vm602, %v611, 0.0
        %v615 = vsel %vm603, %v613, 0.0
        %v616 = vadd.f32 %v614, 0.0
        %v617 = vadd.f32 %v615, 0.0
        %v618 = vadd.f32 %v611, 0.0
        %v619 = vadd.f32 %v613, 0.0
        %v620 = vsel %vm602, inf, %v557
        %v621 = vsel %vm603, inf, %v558
        %v622 = vsel %vm561, %v620, inf
        %623 = vmin.xlane.f32.xlu0 %v622
        %v624 = vpop.xlane.xlu0 %623
        %v625 = vsel %vm561, %v621, inf
        %626 = vmin.xlane.f32.xlu0 %v625
        %v627 = vpop.xlane.xlu0 %626
        %vm628 = vcmp.eq.f32.partialorder %v620, %v624
        %vm629 = vcmp.eq.f32.partialorder %v621, %v627
        %v630 = vsel %vm628, %v560, 8
        %v631 = vsel %vm629, %v560, 8
        %v632 = vsel %vm561, %v630, 2147483647
        %v633 = vand.u32 %v632, 65535
        %v634 = vshra.s32 %v632, 16
        %v635 = vcvt.s32.f32 %v633
        %v636 = vcvt.s32.f32 %v634
        %637 = vmin.xlane.f32.xlu0 %v636
        %v638 = vpop.xlane.xlu0 %637
        %vm639 = vcmp.eq.f32.partialorder %v636, %v638
        %v640 = vsel %vm639, %v635, inf
        %641 = vmin.xlane.f32.xlu0 %v640
        %v642 = vpop.xlane.xlu0 %641
        %v643 = vcvt.f32.s32 %v642
        %v644 = vcvt.f32.s32 %v638
        %v645 = vshll.u32 %v644, 16
        %v646 = vadd.s32 %v645, %v643
        %v647 = vsel %vm561, %v631, 2147483647
        %v648 = vand.u32 %v647, 65535
        %v649 = vshra.s32 %v647, 16
        %v650 = vcvt.s32.f32 %v648
        %v651 = vcvt.s32.f32 %v649
        %652 = vmin.xlane.f32.xlu0 %v651
        %v653 = vpop.xlane.xlu0 %652
        %vm654 = vcmp.eq.f32.partialorder %v651, %v653
        %v655 = vsel %vm654, %v650, inf
        %656 = vmin.xlane.f32.xlu0 %v655
        %v657 = vpop.xlane.xlu0 %656
        %v658 = vcvt.f32.s32 %v657
        %v659 = vcvt.f32.s32 %v653
        %v660 = vshll.u32 %v659, 16
        %v661 = vadd.s32 %v660, %v658
        %vm662 = vcmp.eq.s32.totalorder %v560, %v646
        %vm663 = vcmp.eq.s32.totalorder %v560, %v661
        %v664 = vadd.f32 %v624, %v457
        %v665 = vadd.f32 %v627, %v460
        %v666 = vmax.f32 %v664, 0.0
        %v667 = vmax.f32 %v665, 0.0
        %v668 = vadd.f32 %v666, 1e-08
        %v669 = vadd.f32 %v667, 1e-08
        %v670 = vrcp.pop %v668
        %v671 = vmul.f32 1.0, %v670
        %v672 = vrcp.pop %v669
        %v673 = vmul.f32 1.0, %v672
        %v674 = vsel %vm662, %v671, 0.0
        %v675 = vsel %vm663, %v673, 0.0
        %v676 = vadd.f32 %v616, %v674
        %v677 = vadd.f32 %v617, %v675
        %v678 = vadd.f32 %v618, %v671
        %v679 = vadd.f32 %v619, %v673
        %v680 = vsel %vm662, inf, %v620
        %v681 = vsel %vm663, inf, %v621
        %v682 = vsel %vm561, %v680, inf
        %683 = vmin.xlane.f32.xlu0 %v682
        %v684 = vpop.xlane.xlu0 %683
        %v685 = vsel %vm561, %v681, inf
        %686 = vmin.xlane.f32.xlu0 %v685
        %v687 = vpop.xlane.xlu0 %686
        %vm688 = vcmp.eq.f32.partialorder %v680, %v684
        %vm689 = vcmp.eq.f32.partialorder %v681, %v687
        %v690 = vsel %vm688, %v560, 8
        %v691 = vsel %vm689, %v560, 8
        %v692 = vsel %vm561, %v690, 2147483647
        %v693 = vand.u32 %v692, 65535
        %v694 = vshra.s32 %v692, 16
        %v695 = vcvt.s32.f32 %v693
        %v696 = vcvt.s32.f32 %v694
        %697 = vmin.xlane.f32.xlu0 %v696
        %v698 = vpop.xlane.xlu0 %697
        %vm699 = vcmp.eq.f32.partialorder %v696, %v698
        %v700 = vsel %vm699, %v695, inf
        %701 = vmin.xlane.f32.xlu0 %v700
        %v702 = vpop.xlane.xlu0 %701
        %v703 = vcvt.f32.s32 %v702
        %v704 = vcvt.f32.s32 %v698
        %v705 = vshll.u32 %v704, 16
        %v706 = vadd.s32 %v705, %v703
        %v707 = vsel %vm561, %v691, 2147483647
        %v708 = vand.u32 %v707, 65535
        %v709 = vshra.s32 %v707, 16
        %v710 = vcvt.s32.f32 %v708
        %v711 = vcvt.s32.f32 %v709
        %712 = vmin.xlane.f32.xlu0 %v711
        %v713 = vpop.xlane.xlu0 %712
        %vm714 = vcmp.eq.f32.partialorder %v711, %v713
        %v715 = vsel %vm714, %v710, inf
        %716 = vmin.xlane.f32.xlu0 %v715
        %v717 = vpop.xlane.xlu0 %716
        %v718 = vcvt.f32.s32 %v717
        %v719 = vcvt.f32.s32 %v713
        %v720 = vshll.u32 %v719, 16
        %v721 = vadd.s32 %v720, %v718
        %vm722 = vcmp.eq.s32.totalorder %v560, %v706
        %vm723 = vcmp.eq.s32.totalorder %v560, %v721
        %v724 = vadd.f32 %v684, %v457
        %v725 = vadd.f32 %v687, %v460
        %v726 = vmax.f32 %v724, 0.0
        %v727 = vmax.f32 %v725, 0.0
        %v728 = vadd.f32 %v726, 1e-08
        %v729 = vadd.f32 %v727, 1e-08
        %v730 = vrcp.pop %v728
        %v731 = vmul.f32 1.0, %v730
        %v732 = vrcp.pop %v729
        %v733 = vmul.f32 1.0, %v732
        %v734 = vsel %vm722, %v731, 0.0
        %v735 = vsel %vm723, %v733, 0.0
        %v736 = vadd.f32 %v676, %v734
        %v737 = vadd.f32 %v677, %v735
        %v738 = vadd.f32 %v678, %v731
        %v739 = vadd.f32 %v679, %v733
        %v740 = vrcp.pop %v738
        %v741 = vmul.f32 1.0, %v740
        %v742 = vrcp.pop %v739
        %v743 = vmul.f32 1.0, %v742
        %v744 = vmul.f32 %v736, %v741
        %v745 = vmul.f32 %v737, %v743
        %v746 = vpack.c.bf16 %v745, %v744
        %v748 = vsel %vm561, %v418, 0
        %v751 = vsel %vm561, %v746, 0
        %753 = vmatprep.subr.bf16.mxu0 0
        %754 = vmatpush1.bf16.xpose.msra.mxu0 %v751
        %755 = vmatprep.subr.bf16.mxu0 0
        %756 = vmatpush1.bf16.xpose.msra.mxu0 0
        %757 = vmatprep.subr.bf16.mxu0 0
        %758 = vmatpush1.bf16.xpose.msra.mxu0 0
        %759 = vmatprep.subr.bf16.mxu0 0
        %760 = vmatpush1.bf16.xpose.msra.mxu0 0
        %761 = vmatprep.subr.bf16.mxu0 0
        %762 = vmatpush1.bf16.xpose.msra.mxu0 0
        %763 = vmatprep.subr.bf16.mxu0 0
        %764 = vmatpush1.bf16.xpose.msra.mxu0 0
        %765 = vmatprep.subr.bf16.mxu0 0
        %766 = vmatpush1.bf16.xpose.msra.mxu0 0
        %767 = vmatprep.subr.bf16.mxu0 0
        %768 = vmatpush1.bf16.xpose.msra.mxu0 0
        %769 = vmatprep.subr.bf16.mxu0 0
        %770 = vmatpush1.bf16.xpose.msra.mxu0 0
        %771 = vmatprep.subr.bf16.mxu0 0
        %772 = vmatpush1.bf16.xpose.msra.mxu0 0
        %773 = vmatprep.subr.bf16.mxu0 0
        %774 = vmatpush1.bf16.xpose.msra.mxu0 0
        %775 = vmatprep.subr.bf16.mxu0 0
        %776 = vmatpush1.bf16.xpose.msra.mxu0 0
        %777 = vmatprep.subr.bf16.mxu0 0
        %778 = vmatpush1.bf16.xpose.msra.mxu0 0
        %779 = vmatprep.subr.bf16.mxu0 0
        %780 = vmatpush1.bf16.xpose.msra.mxu0 0
        %781 = vmatprep.subr.bf16.mxu0 0
        %782 = vmatpush1.bf16.xpose.msra.mxu0 0
        %783 = vmatprep.subr.bf16.mxu0 0
        %784 = vmatpush1.bf16.xpose.msra.mxu0 0
        %785 = vmatprep.mubr.bf16.mxu0 0
        %786 = vmatmul.mubr.bf16.gmra.mrb[0].mxu0 %v748
        %v787 = vpop.f32.mrb[0].mxu0
        %v788 = vadd.f32 0.0, %v787
        %v789 = vpop.f32.mrb[0].mxu0
        %v790 = vpop.f32.mrb[0].mxu0
        %v791 = vpop.f32.mrb[0].mxu0
        %792 = vdwg.mxu0
        %v793 = vpack.c.bf16 %v788, %v788
        %v794 = vld [vmem:[%s4] sm:$0xf]
        %v795 = vld [vmem:[%s4 + $0x4] sm:$0xf]
        %v796 = vld [vmem:[%s4 + $0x8] sm:$0xf]
        %v797 = vld [vmem:[%s4 + $0xc] sm:$0xf]
        %v798 = vld [vmem:[%s5] sm:$0xf]
        %v799 = vld [vmem:[%s5 + $0x4] sm:$0xf]
        %v800 = vld [vmem:[%s5 + $0x8] sm:$0xf]
        %v801 = vld [vmem:[%s5 + $0xc] sm:$0xf]
        %v802 = vld [vmem:[%s6] sm:$0xff]
        %v803 = vld [vmem:[%s6 + $0x8] sm:$0xff]
        %v804 = vld [vmem:[%s6 + $0x10] sm:$0xff]
        %v805 = vld [vmem:[%s6 + $0x18] sm:$0xff]
        %v810 = vunpack.c.l.b16 %v798
        %v811 = vunpack.c.l.b16 %v799
        %v812 = vunpack.c.l.b16 %v800
        %v813 = vunpack.c.l.b16 %v801
        %v814 = vpack.c.b16 %v811, %v810
        %v815 = vpack.c.b16 %v813, %v812
        %vm816 = vcmask 31744
        %v818 = vsel %vm816, %v814, 0
        %v821 = vsel %vm816, %v815, 0
        %vm823 = vcmask 1041408
        %v825 = vsel %vm823, %v793, 0
        %827 = vmatprep.subr.bf16.mxu0 0
        %828 = vmatpush1.bf16.msra.mxu0 %v825
        %829 = vmatprep.subr.bf16.mxu0 0
        %830 = vmatpush1.bf16.msra.mxu0 0
        %831 = vmatprep.subr.bf16.mxu0 0
        %832 = vmatpush1.bf16.msra.mxu0 0
        %833 = vmatprep.subr.bf16.mxu0 0
        %834 = vmatpush1.bf16.msra.mxu0 0
        %835 = vmatprep.subr.bf16.mxu0 0
        %836 = vmatpush1.bf16.msra.mxu0 0
        %837 = vmatprep.subr.bf16.mxu0 0
        %838 = vmatpush1.bf16.msra.mxu0 0
        %839 = vmatprep.subr.bf16.mxu0 0
        %840 = vmatpush1.bf16.msra.mxu0 0
        %841 = vmatprep.subr.bf16.mxu0 0
        %842 = vmatpush1.bf16.msra.mxu0 0
        %843 = vmatprep.subr.bf16.mxu0 0
        %844 = vmatpush1.bf16.msra.mxu0 0
        %845 = vmatprep.subr.bf16.mxu0 0
        %846 = vmatpush1.bf16.msra.mxu0 0
        %847 = vmatprep.subr.bf16.mxu0 0
        %848 = vmatpush1.bf16.msra.mxu0 0
        %849 = vmatprep.subr.bf16.mxu0 0
        %850 = vmatpush1.bf16.msra.mxu0 0
        %851 = vmatprep.subr.bf16.mxu0 0
        %852 = vmatpush1.bf16.msra.mxu0 0
        %853 = vmatprep.subr.bf16.mxu0 0
        %854 = vmatpush1.bf16.msra.mxu0 0
        %855 = vmatprep.subr.bf16.mxu0 0
        %856 = vmatpush1.bf16.msra.mxu0 0
        %857 = vmatprep.subr.bf16.mxu0 0
        %858 = vmatpush1.bf16.msra.mxu0 0
        %859 = vmatprep.mubr.bf16.mxu0 0
        %860 = vmatmul.mubr.bf16.gmra.mrb[0].mxu0 %v818
        %v861 = vpop.f32.mrb[0].mxu0
        %v862 = vadd.f32 0.0, %v861
        %v863 = vpop.f32.mrb[0].mxu0
        %v864 = vpop.f32.mrb[0].mxu0
        %v865 = vadd.f32 0.0, %v864
        %v866 = vpop.f32.mrb[0].mxu0
        %867 = vmatprep.mubr.bf16.mxu0 0
        %868 = vmatmul.mubr.bf16.gmra.mrb[0].mxu0 %v821
        %v869 = vpop.f32.mrb[0].mxu0
        %v870 = vadd.f32 0.0, %v869
        %v871 = vpop.f32.mrb[0].mxu0
        %v872 = vpop.f32.mrb[0].mxu0
        %v873 = vadd.f32 0.0, %v872
        %v874 = vpop.f32.mrb[0].mxu0
        %875 = vdwg.mxu0
        %v880 = vunpack.c.l.b16 %v794
        %v881 = vunpack.c.l.b16 %v795
        %v882 = vunpack.c.l.b16 %v796
        %v883 = vunpack.c.l.b16 %v797
        %v884 = vpack.c.b16 %v881, %v880
        %v885 = vpack.c.b16 %v883, %v882
        %v887 = vsel %vm816, %v884, 0
        %v890 = vsel %vm816, %v885, 0
        %v893 = vsel %vm823, %v419, 0
        %895 = vmatprep.subr.bf16.mxu0 0
        %896 = vmatpush1.bf16.msra.mxu0 %v893
        %897 = vmatprep.subr.bf16.mxu0 0
        %898 = vmatpush1.bf16.msra.mxu0 0
        %899 = vmatprep.subr.bf16.mxu0 0
        %900 = vmatpush1.bf16.msra.mxu0 0
        %901 = vmatprep.subr.bf16.mxu0 0
        %902 = vmatpush1.bf16.msra.mxu0 0
        %903 = vmatprep.subr.bf16.mxu0 0
        %904 = vmatpush1.bf16.msra.mxu0 0
        %905 = vmatprep.subr.bf16.mxu0 0
        %906 = vmatpush1.bf16.msra.mxu0 0
        %907 = vmatprep.subr.bf16.mxu0 0
        %908 = vmatpush1.bf16.msra.mxu0 0
        %909 = vmatprep.subr.bf16.mxu0 0
        %910 = vmatpush1.bf16.msra.mxu0 0
        %911 = vmatprep.subr.bf16.mxu0 0
        %912 = vmatpush1.bf16.msra.mxu0 0
        %913 = vmatprep.subr.bf16.mxu0 0
        %914 = vmatpush1.bf16.msra.mxu0 0
        %915 = vmatprep.subr.bf16.mxu0 0
        %916 = vmatpush1.bf16.msra.mxu0 0
        %917 = vmatprep.subr.bf16.mxu0 0
        %918 = vmatpush1.bf16.msra.mxu0 0
        %919 = vmatprep.subr.bf16.mxu0 0
        %920 = vmatpush1.bf16.msra.mxu0 0
        %921 = vmatprep.subr.bf16.mxu0 0
        %922 = vmatpush1.bf16.msra.mxu0 0
        %923 = vmatprep.subr.bf16.mxu0 0
        %924 = vmatpush1.bf16.msra.mxu0 0
        %925 = vmatprep.subr.bf16.mxu0 0
        %926 = vmatpush1.bf16.msra.mxu0 0
        %927 = vmatprep.mubr.bf16.mxu0 0
        %928 = vmatmul.mubr.bf16.gmra.mrb[0].mxu0 %v887
        %v929 = vpop.f32.mrb[0].mxu0
        %v930 = vadd.f32 %v862, %v929
        %v931 = vpop.f32.mrb[0].mxu0
        %v932 = vpop.f32.mrb[0].mxu0
        %v933 = vadd.f32 %v865, %v932
        %v934 = vpop.f32.mrb[0].mxu0
        %935 = vmatprep.mubr.bf16.mxu0 0
        %936 = vmatmul.mubr.bf16.gmra.mrb[0].mxu0 %v890
        %v937 = vpop.f32.mrb[0].mxu0
        %v938 = vadd.f32 %v870, %v937
        %v939 = vpop.f32.mrb[0].mxu0
        %v940 = vpop.f32.mrb[0].mxu0
        %v941 = vadd.f32 %v873, %v940
        %v942 = vpop.f32.mrb[0].mxu0
        %943 = vdwg.mxu0
        %945 = vset.pattern.permute.xlu0 0
        %946 = vperm.xlu0 %945, %v802
        %v947 = vpop.permute.xlu0 %946
        %950 = vset.pattern.permute.xlu0 0
        %951 = vperm.xlu0 %950, %v803
        %v952 = vpop.permute.xlu0 %951
        %955 = vset.pattern.permute.xlu0 0
        %956 = vperm.xlu0 %955, %v804
        %v957 = vpop.permute.xlu0 %956
        %960 = vset.pattern.permute.xlu0 0
        %961 = vperm.xlu0 %960, %v805
        %v962 = vpop.permute.xlu0 %961
        %v964 = vadd.f32 %v930, %v947
        %v965 = vadd.f32 %v933, %v952
        %v966 = vadd.f32 %v938, %v957
        %v967 = vadd.f32 %v941, %v962
        %v968 = vmax.f32 %v964, 0.0
        %v969 = vmax.f32 %v965, 0.0
        %v970 = vmax.f32 %v966, 0.0
        %v971 = vmax.f32 %v967, 0.0
        %v972 = vld [vmem:[%s7] sm:$0xf]
        %v973 = vld [vmem:[%s7 + $0x4] sm:$0xf]
        %v974 = vld [vmem:[%s8] sm:$0xff]
        %v975 = vld [vmem:[%s8 + $0x8] sm:$0xff]
        %v976 = vpack.c.bf16 %v969, %v968
        %v977 = vpack.c.bf16 %v971, %v970
        %979 = vset.pattern.permute.xlu0 0
        %980 = vperm.xlu0 %979, %v974
        %v981 = vpop.permute.xlu0 %980
        %984 = vset.pattern.permute.xlu0 0
        %985 = vperm.xlu0 %984, %v975
        %v986 = vpop.permute.xlu0 %985
        %v990 = vunpack.c.l.b16 %v972
        %v991 = vunpack.c.l.b16 %v973
        %v992 = vpack.c.b16 %v991, %v990
        %vm993 = vcmask 261120
        %v995 = vsel %vm993, %v992, 0
        %997 = vmatprep.subr.bf16.mxu0 0
        %998 = vmatpush1.bf16.msra.mxu0 %v976
        %999 = vmatprep.subr.bf16.mxu0 0
        %1000 = vmatpush1.bf16.msra.mxu0 %v977
        %1001 = vmatprep.subr.bf16.mxu0 0
        %1002 = vmatpush1.bf16.msra.mxu0 0
        %1003 = vmatprep.subr.bf16.mxu0 0
        %1004 = vmatpush1.bf16.msra.mxu0 0
        %1005 = vmatprep.subr.bf16.mxu0 0
        %1006 = vmatpush1.bf16.msra.mxu0 0
        %1007 = vmatprep.subr.bf16.mxu0 0
        %1008 = vmatpush1.bf16.msra.mxu0 0
        %1009 = vmatprep.subr.bf16.mxu0 0
        %1010 = vmatpush1.bf16.msra.mxu0 0
        %1011 = vmatprep.subr.bf16.mxu0 0
        %1012 = vmatpush1.bf16.msra.mxu0 0
        %1013 = vmatprep.subr.bf16.mxu0 0
        %1014 = vmatpush1.bf16.msra.mxu0 0
        %1015 = vmatprep.subr.bf16.mxu0 0
        %1016 = vmatpush1.bf16.msra.mxu0 0
        %1017 = vmatprep.subr.bf16.mxu0 0
        %1018 = vmatpush1.bf16.msra.mxu0 0
        %1019 = vmatprep.subr.bf16.mxu0 0
        %1020 = vmatpush1.bf16.msra.mxu0 0
        %1021 = vmatprep.subr.bf16.mxu0 0
        %1022 = vmatpush1.bf16.msra.mxu0 0
        %1023 = vmatprep.subr.bf16.mxu0 0
        %1024 = vmatpush1.bf16.msra.mxu0 0
        %1025 = vmatprep.subr.bf16.mxu0 0
        %1026 = vmatpush1.bf16.msra.mxu0 0
        %1027 = vmatprep.subr.bf16.mxu0 0
        %1028 = vmatpush1.bf16.msra.mxu0 0
        %1029 = vmatprep.mubr.bf16.mxu0 0
        %1030 = vmatmul.mubr.bf16.gmra.mrb[0].mxu0 %v995
        %v1031 = vpop.f32.mrb[0].mxu0
        %v1032 = vadd.f32 %v981, %v1031
        %v1033 = vpop.f32.mrb[0].mxu0
        %v1034 = vpop.f32.mrb[0].mxu0
        %v1035 = vadd.f32 %v986, %v1034
        %v1036 = vpop.f32.mrb[0].mxu0
        %1037 = vdwg.mxu0
        %v1038 = vmax.f32 %v1032, 0.0
        %v1039 = vmax.f32 %v1035, 0.0
        %vm1040 = vcmask 130048
        %1041 = vst.msk [vmem:[%s392] sm:$0xff] %vm1040, %v1038
        %1042 = vst.msk [vmem:[%s392 + $0x8] sm:$0xff] %vm1040, %v1039
        %s1043 = sand.u32 %s258, 1
        %s1044 = scalar_lea.sflag [#allocation3], %s1043
        %s1045 = sand.u32 %s258, 1
        %s1046 = smul.addr %s1045, 16
        %s1047 = scalar_lea.vmem [#allocation2], %s1046
        // Predicated region
        $region57: #{tpu_custom_call.1} parent=55 // pred_check
          %p1048 = pneg %p268
        $region58: #{tpu_custom_call.1} parent=55 // pred_check_branch
          %1050 = sbr.rel (%p1048) target = $region60
        $region59: #{tpu_custom_call.1} parent=55 // pred_region
          %s1052 = ssub.s32 256, 256
          %1053 = vsyncadd %s1044, %s1052
          %s1054 = smul.addr %s27, 2
          %s1055 = sadd.s32 %s28, %s1054
          %s1056 = smul.addr %s1055, 128
          %s1057 = scalar_lea.hbm %s9, %s1056
          %s1058 = sshll.u32 %s1047, 4
          %s1059 = int_to_ptr.vmem [resolvable:$true] %s1058
          %1064 = dma.vmem_to_hbm [thread:$0]  %s1059, 256, %s1057, %s1044, 128, 128, 8
        $region60: #{tpu_custom_call.1} parent=55 // pred_fallthru
          _
      $region56: #{tpu_custom_call.1} parent=5 // pred_fallthru
        _
      %p1065 = scmp.le.s32.totalorder 2, %s18
      // Predicated region
      $region61: #{tpu_custom_call.1} parent=5 // pred_check
        %p1066 = pneg %p1065
      $region62: #{tpu_custom_call.1} parent=5 // pred_check_branch
        %1068 = sbr.rel (%p1066) target = $region64
      $region63: #{tpu_custom_call.1} parent=5 // pred_region
        %s1069 = ssub.s32 %s18, 2
        // Predicated region
        $region65: #{tpu_custom_call.1} parent=63 // pred_check
          %p1070 = pneg %p274
        $region66: #{tpu_custom_call.1} parent=63 // pred_check_branch
          %1072 = sbr.rel (%p1070) target = $region68
        $region67: #{tpu_custom_call.1} parent=63 // pred_region
          %s1073 = sand.u32 %s259, 1
          %s1074 = scalar_lea.sflag [#allocation3], %s1073
          %s1075 = sand.u32 %s259, 1
          %s1076 = smul.addr %s1075, 16
          %s1077 = scalar_lea.vmem [#allocation2], %s1076
          %1078 = dma.done %s1074, 256
        $region68: #{tpu_custom_call.1} parent=63 // pred_fallthru
          _
      $region64: #{tpu_custom_call.1} parent=5 // pred_fallthru
        _
    $region6: #{tpu_custom_call.1} parent=1 // loop_footer
      %s22 = sadd.s32 1, %s18
    $region7: #{tpu_custom_call.1} parent=1 // loop_footer_branch
      %17 = sbr.rel target = $region3
    $region8: #{tpu_custom_call.1} parent=1 // loop_exit
      _
    %1079 = vsyncpa [#allocation3], 1
    %s1080 = scalar_lea.sflag [#allocation3], 1
    %1081 = vsyncpa %s1080, 1

// kernel: tpu_custom_call.1
$region0: #{tpu_custom_call.1}
  #allocation0 [shape = 'u32[]', space=smem, size = 0x4, offset = 0x4, fixed_abs, tag = 'smem constant byte address 0x4 - core index']
  #allocation1 [shape = 'u32[144,128]{1,0:T(1,128)}', space=vmem, size = 0x12000, scoped, tag = 'internal scratch']
  %s0 = inlined_call_operand.vmem [shape: f32[2,3,16], index: 0, kind: input, shape index: {}]
  %s1 = inlined_call_operand.vmem [shape: f32[2,3,8], index: 1, kind: input, shape index: {}]
  %s2 = inlined_call_operand.vmem [shape: bf16[2,4,8], index: 2, kind: input, shape index: {}]
  %s3 = inlined_call_operand.vmem [shape: bf16[2,4,16], index: 3, kind: input, shape index: {}]
  %s4 = inlined_call_operand.vmem [shape: bf16[32,4], index: 4, kind: input, shape index: {}]
  %s5 = inlined_call_operand.vmem [shape: bf16[32,4], index: 5, kind: input, shape index: {}]
  %s6 = inlined_call_operand.vmem [shape: f32[32,1], index: 6, kind: input, shape index: {}]
  %s7 = inlined_call_operand.vmem [shape: bf16[16,32], index: 7, kind: input, shape index: {}]
  %s8 = inlined_call_operand.vmem [shape: f32[16,1], index: 8, kind: input, shape index: {}]
  %s9 = inlined_call_operand.hbm [shape: f32[2,16,16], index: 9, kind: output, shape index: {}]
  %s10 = sld [smem:[#allocation0]]
  $region69: #{tpu_custom_call.1} parent=0
    _
  %s12 = ssub.s32 1, %s10
  %s13 = scalar_select 0, %s12, %s10
  $region1: #{tpu_custom_call.1} parent=0
    #allocation2 [shape = 'u8[16384]{0}', space=vmem, size = 0x4000, scoped, tag = 'output window, operand 0']
    #allocation3 [shape = 's32[2]{0}', space=sflag, size = 0x8, scoped, tag = 'scoped memory for tpu_custom_call.1']
    %14 = vsyncpa [#allocation3], 0
    %s15 = scalar_lea.sflag [#allocation3], 1
    %16 = vsyncpa %s15, 0
    loop: start=0, step=1, limit=4
    $region2: #{tpu_custom_call.1} parent=1 // loop_pre_header
      _
    $region3: #{tpu_custom_call.1} parent=1 // loop_header
      %s18 = sphi 0, %s22
      %p19 = scmp.ge.s32.totalorder %s18, 4
      %s25 = sphi 0, %s37
      %s26 = sphi 0, %s33
      %s27 = sphi 0, %s25
      %s28 = sphi 0, %s26
      %s29 = sphi 0, %s27
      %s30 = sphi 0, %s28
      %s42 = sphi 0, %s44
      %s45 = sphi 0, %s42
      %s46 = sphi 0, %s45
      %s62 = sphi 0, %s46
      %s68 = sphi 0, %s70
      %s71 = sphi 0, %s68
      %s72 = sphi 0, %s71
      %s88 = sphi 0, %s72
      %s94 = sphi 0, %s96
      %s97 = sphi 0, %s94
      %s98 = sphi 0, %s97
      %s114 = sphi 0, %s98
      %s122 = sphi 0, %s124
      %s125 = sphi 0, %s122
      %s126 = sphi 0, %s125
      %s142 = sphi 0, %s126
      %s146 = sphi 0, %s146
      %s148 = sphi 0, %s146
      %s149 = sphi 0, %s148
      %s163 = sphi 0, %s149
      %s167 = sphi 0, %s167
      %s169 = sphi 0, %s167
      %s170 = sphi 0, %s169
      %s184 = sphi 0, %s170
      %s188 = sphi 0, %s188
      %s190 = sphi 0, %s188
      %s191 = sphi 0, %s190
      %s205 = sphi 0, %s191
      %s209 = sphi 0, %s209
      %s211 = sphi 0, %s209
      %s212 = sphi 0, %s211
      %s226 = sphi 0, %s212
      %s230 = sphi 0, %s230
      %s232 = sphi 0, %s230
      %s233 = sphi 0, %s232
      %s247 = sphi 0, %s233
      %s255 = sphi 0, %s257
      %s258 = sphi 0, %s255
      %s259 = sphi 0, %s258
      %s275 = sphi 0, %s259
    $region4: #{tpu_custom_call.1} parent=1 // loop_header_branch
      %21 = sbr.rel (%p19) target = $region8
    $region5: #{tpu_custom_call.1} parent=1 // loop_body
      %s23 = ssub.s32 %s18, 1
      %s24 = ssub.s32 %s18, 2
      %s31 = sadd.s32 1, %s26
      %p32 = scmp.ge.s32.totalorder %s31, 1
      %s33 = scalar_select %p32, 0, %s31
      %s34 = sadd.s32 1, %s25
      %s35 = scalar_select %p32, %s34, %s25
      %p36 = scmp.ge.s32.totalorder %s35, 2
      %s37 = scalar_select %p36, 0, %s35
      %s38 = ssub.s32 %s25, %s37
      %s39 = ssub.s32 %s26, %s33
      %s40 = sor.u32 %s38, %s39
      %p41 = scmp.eq.s32.totalorder %s40, 0
      %s43 = sadd.s32 %s42, 1
      %s44 = scalar_select %p41, %s42, %s43
      %p47 = pneg %p41
      %p48 = scmp.eq.s32.totalorder %s18, 1
      %p49 = por %p47, %p48
      %p50 = scmp.ne.s32.totalorder %s42, %s45
      %p51 = scmp.eq.s32.totalorder %s18, 0
      %p52 = por %p50, %p51
      %p53 = scmp.ne.s32.totalorder %s42, %s45
      %p54 = scmp.eq.s32.totalorder %s23, 1
      %p55 = por %p53, %p54
      %p56 = scmp.ne.s32.totalorder %s45, %s46
      %p57 = scmp.eq.s32.totalorder %s23, 0
      %p58 = por %p56, %p57
      %p59 = scmp.ne.s32.totalorder %s45, %s46
      %p60 = scmp.eq.s32.totalorder %s24, 1
      %p61 = por %p59, %p60
      %p63 = scmp.ne.s32.totalorder %s46, %s62
      %p64 = scmp.eq.s32.totalorder %s24, 0
      %p65 = por %p63, %p64
      %s66 = ssub.s32 %s25, %s37
      %p67 = scmp.eq.s32.totalorder %s66, 0
      %s69 = sadd.s32 %s68, 1
      %s70 = scalar_select %p67, %s68, %s69
      %p73 = pneg %p67
      %p74 = scmp.eq.s32.totalorder %s18, 1
      %p75 = por %p73, %p74
      %p76 = scmp.ne.s32.totalorder %s68, %s71
      %p77 = scmp.eq.s32.totalorder %s18, 0
      %p78 = por %p76, %p77
      %p79 = scmp.ne.s32.totalorder %s68, %s71
      %p80 = scmp.eq.s32.totalorder %s23, 1
      %p81 = por %p79, %p80
      %p82 = scmp.ne.s32.totalorder %s71, %s72
      %p83 = scmp.eq.s32.totalorder %s23, 0
      %p84 = por %p82, %p83
      %p85 = scmp.ne.s32.totalorder %s71, %s72
      %p86 = scmp.eq.s32.totalorder %s24, 1
      %p87 = por %p85, %p86
      %p89 = scmp.ne.s32.totalorder %s72, %s88
      %p90 = scmp.eq.s32.totalorder %s24, 0
      %p91 = por %p89, %p90
      %s92 = ssub.s32 %s25, %s37
      %p93 = scmp.eq.s32.totalorder %s92, 0
      %s95 = sadd.s32 %s94, 1
      %s96 = scalar_select %p93, %s94, %s95
      %p99 = pneg %p93
      %p100 = scmp.eq.s32.totalorder %s18, 1
      %p101 = por %p99, %p100
      %p102 = scmp.ne.s32.totalorder %s94, %s97
      %p103 = scmp.eq.s32.totalorder %s18, 0
      %p104 = por %p102, %p103
      %p105 = scmp.ne.s32.totalorder %s94, %s97
      %p106 = scmp.eq.s32.totalorder %s23, 1
      %p107 = por %p105, %p106
      %p108 = scmp.ne.s32.totalorder %s97, %s98
      %p109 = scmp.eq.s32.totalorder %s23, 0
      %p110 = por %p108, %p109
      %p111 = scmp.ne.s32.totalorder %s97, %s98
      %p112 = scmp.eq.s32.totalorder %s24, 1
      %p113 = por %p111, %p112
      %p115 = scmp.ne.s32.totalorder %s98, %s114
      %p116 = scmp.eq.s32.totalorder %s24, 0
      %p117 = por %p115, %p116
      %s118 = ssub.s32 %s25, %s37
      %s119 = ssub.s32 %s26, %s33
      %s120 = sor.u32 %s118, %s119
      %p121 = scmp.eq.s32.totalorder %s120, 0
      %s123 = sadd.s32 %s122, 1
      %s124 = scalar_select %p121, %s122, %s123
      %p127 = pneg %p121
      %p128 = scmp.eq.s32.totalorder %s18, 1
      %p129 = por %p127, %p128
      %p130 = scmp.ne.s32.totalorder %s122, %s125
      %p131 = scmp.eq.s32.totalorder %s18, 0
      %p132 = por %p130, %p131
      %p133 = scmp.ne.s32.totalorder %s122, %s125
      %p134 = scmp.eq.s32.totalorder %s23, 1
      %p135 = por %p133, %p134
      %p136 = scmp.ne.s32.totalorder %s125, %s126
      %p137 = scmp.eq.s32.totalorder %s23, 0
      %p138 = por %p136, %p137
      %p139 = scmp.ne.s32.totalorder %s125, %s126
      %p140 = scmp.eq.s32.totalorder %s24, 1
      %p141 = por %p139, %p140
      %p143 = scmp.ne.s32.totalorder %s126, %s142
      %p144 = scmp.eq.s32.totalorder %s24, 0
      %p145 = por %p143, %p144
      %s147 = sadd.s32 %s146, 1
      %p150 = scmp.eq.s32.totalorder %s18, 1
      %p151 = scmp.ne.s32.totalorder %s146, %s148
      %p152 = scmp.eq.s32.totalorder %s18, 0
      %p153 = por %p151, %p152
      %p154 = scmp.ne.s32.totalorder %s146, %s148
      %p155 = scmp.eq.s32.totalorder %s23, 1
      %p156 = por %p154, %p155
      %p157 = scmp.ne.s32.totalorder %s148, %s149
      %p158 = scmp.eq.s32.totalorder %s23, 0
      %p159 = por %p157, %p158
      %p160 = scmp.ne.s32.totalorder %s148, %s149
      %p161 = scmp.eq.s32.totalorder %s24, 1
      %p162 = por %p160, %p161
      %p164 = scmp.ne.s32.totalorder %s149, %s163
      %p165 = scmp.eq.s32.totalorder %s24, 0
      %p166 = por %p164, %p165
      %s168 = sadd.s32 %s167, 1
      %p171 = scmp.eq.s32.totalorder %s18, 1
      %p172 = scmp.ne.s32.totalorder %s167, %s169
      %p173 = scmp.eq.s32.totalorder %s18, 0
      %p174 = por %p172, %p173
      %p175 = scmp.ne.s32.totalorder %s167, %s169
      %p176 = scmp.eq.s32.totalorder %s23, 1
      %p177 = por %p175, %p176
      %p178 = scmp.ne.s32.totalorder %s169, %s170
      %p179 = scmp.eq.s32.totalorder %s23, 0
      %p180 = por %p178, %p179
      %p181 = scmp.ne.s32.totalorder %s169, %s170
      %p182 = scmp.eq.s32.totalorder %s24, 1
      %p183 = por %p181, %p182
      %p185 = scmp.ne.s32.totalorder %s170, %s184
      %p186 = scmp.eq.s32.totalorder %s24, 0
      %p187 = por %p185, %p186
      %s189 = sadd.s32 %s188, 1
      %p192 = scmp.eq.s32.totalorder %s18, 1
      %p193 = scmp.ne.s32.totalorder %s188, %s190
      %p194 = scmp.eq.s32.totalorder %s18, 0
      %p195 = por %p193, %p194
      %p196 = scmp.ne.s32.totalorder %s188, %s190
      %p197 = scmp.eq.s32.totalorder %s23, 1
      %p198 = por %p196, %p197
      %p199 = scmp.ne.s32.totalorder %s190, %s191
      %p200 = scmp.eq.s32.totalorder %s23, 0
      %p201 = por %p199, %p200
      %p202 = scmp.ne.s32.totalorder %s190, %s191
      %p203 = scmp.eq.s32.totalorder %s24, 1
      %p204 = por %p202, %p203
      %p206 = scmp.ne.s32.totalorder %s191, %s205
      %p207 = scmp.eq.s32.totalorder %s24, 0
      %p208 = por %p206, %p207
      %s210 = sadd.s32 %s209, 1
      %p213 = scmp.eq.s32.totalorder %s18, 1
      %p214 = scmp.ne.s32.totalorder %s209, %s211
      %p215 = scmp.eq.s32.totalorder %s18, 0
      %p216 = por %p214, %p215
      %p217 = scmp.ne.s32.totalorder %s209, %s211
      %p218 = scmp.eq.s32.totalorder %s23, 1
      %p219 = por %p217, %p218
      %p220 = scmp.ne.s32.totalorder %s211, %s212
      %p221 = scmp.eq.s32.totalorder %s23, 0
      %p222 = por %p220, %p221
      %p223 = scmp.ne.s32.totalorder %s211, %s212
      %p224 = scmp.eq.s32.totalorder %s24, 1
      %p225 = por %p223, %p224
      %p227 = scmp.ne.s32.totalorder %s212, %s226
      %p228 = scmp.eq.s32.totalorder %s24, 0
      %p229 = por %p227, %p228
      %s231 = sadd.s32 %s230, 1
      %p234 = scmp.eq.s32.totalorder %s18, 1
      %p235 = scmp.ne.s32.totalorder %s230, %s232
      %p236 = scmp.eq.s32.totalorder %s18, 0
      %p237 = por %p235, %p236
      %p238 = scmp.ne.s32.totalorder %s230, %s232
      %p239 = scmp.eq.s32.totalorder %s23, 1
      %p240 = por %p238, %p239
      %p241 = scmp.ne.s32.totalorder %s232, %s233
      %p242 = scmp.eq.s32.totalorder %s23, 0
      %p243 = por %p241, %p242
      %p244 = scmp.ne.s32.totalorder %s232, %s233
      %p245 = scmp.eq.s32.totalorder %s24, 1
      %p246 = por %p244, %p245
      %p248 = scmp.ne.s32.totalorder %s233, %s247
      %p249 = scmp.eq.s32.totalorder %s24, 0
      %p250 = por %p248, %p249
      %s251 = ssub.s32 %s25, %s37
      %s252 = ssub.s32 %s26, %s33
      %s253 = sor.u32 %s251, %s252
      %p254 = scmp.eq.s32.totalorder %s253, 0
      %s256 = sadd.s32 %s255, 1
      %s257 = scalar_select %p254, %s255, %s256
      %p260 = pneg %p254
      %p261 = scmp.eq.s32.totalorder %s18, 1
      %p262 = por %p260, %p261
      %p263 = scmp.ne.s32.totalorder %s255, %s258
      %p264 = scmp.eq.s32.totalorder %s18, 0
      %p265 = por %p263, %p264
      %p266 = scmp.ne.s32.totalorder %s255, %s258
      %p267 = scmp.eq.s32.totalorder %s23, 1
      %p268 = por %p266, %p267
      %p269 = scmp.ne.s32.totalorder %s258, %s259
      %p270 = scmp.eq.s32.totalorder %s23, 0
      %p271 = por %p269, %p270
      %p272 = scmp.ne.s32.totalorder %s258, %s259
      %p273 = scmp.eq.s32.totalorder %s24, 1
      %p274 = por %p272, %p273
      %p276 = scmp.ne.s32.totalorder %s259, %s275
      %p277 = scmp.eq.s32.totalorder %s24, 0
      %p278 = por %p276, %p277
      %p279 = scmp.le.s32.totalorder 1, %s18
      %p280 = scmp.lt.s32.totalorder %s18, 3
      %p281 = pnand %p279, %p280
      %p282 = pneg %p281
      // Predicated region
      $region9: #{tpu_custom_call.1} parent=5 // pred_check
        _
      $region10: #{tpu_custom_call.1} parent=5 // pred_check_branch
        %284 = sbr.rel (%p281) target = $region12
      $region11: #{tpu_custom_call.1} parent=5 // pred_region
        %s285 = ssub.s32 %s18, 1
        // Predicated region
        $region13: #{tpu_custom_call.1} parent=11 // pred_check
          %p286 = pneg %p159
        $region14: #{tpu_custom_call.1} parent=11 // pred_check_branch
          %288 = sbr.rel (%p286) target = $region16
        $region15: #{tpu_custom_call.1} parent=11 // pred_region
          _
        $region16: #{tpu_custom_call.1} parent=11 // pred_fallthru
          _
        // Predicated region
        $region17: #{tpu_custom_call.1} parent=11 // pred_check
          %p289 = pneg %p180
        $region18: #{tpu_custom_call.1} parent=11 // pred_check_branch
          %291 = sbr.rel (%p289) target = $region20
        $region19: #{tpu_custom_call.1} parent=11 // pred_region
          _
        $region20: #{tpu_custom_call.1} parent=11 // pred_fallthru
          _
        // Predicated region
        $region21: #{tpu_custom_call.1} parent=11 // pred_check
          %p292 = pneg %p201
        $region22: #{tpu_custom_call.1} parent=11 // pred_check_branch
          %294 = sbr.rel (%p292) target = $region24
        $region23: #{tpu_custom_call.1} parent=11 // pred_region
          _
        $region24: #{tpu_custom_call.1} parent=11 // pred_fallthru
          _
        // Predicated region
        $region25: #{tpu_custom_call.1} parent=11 // pred_check
          %p295 = pneg %p222
        $region26: #{tpu_custom_call.1} parent=11 // pred_check_branch
          %297 = sbr.rel (%p295) target = $region28
        $region27: #{tpu_custom_call.1} parent=11 // pred_region
          _
        $region28: #{tpu_custom_call.1} parent=11 // pred_fallthru
          _
        // Predicated region
        $region29: #{tpu_custom_call.1} parent=11 // pred_check
          %p298 = pneg %p243
        $region30: #{tpu_custom_call.1} parent=11 // pred_check_branch
          %300 = sbr.rel (%p298) target = $region32
        $region31: #{tpu_custom_call.1} parent=11 // pred_region
          _
        $region32: #{tpu_custom_call.1} parent=11 // pred_fallthru
          _
      $region12: #{tpu_custom_call.1} parent=5 // pred_fallthru
        _
      %p301 = scmp.lt.s32.totalorder %s18, 2
      // Predicated region
      $region33: #{tpu_custom_call.1} parent=5 // pred_check
        %p302 = pneg %p301
      $region34: #{tpu_custom_call.1} parent=5 // pred_check_branch
        %304 = sbr.rel (%p302) target = $region36
      $region35: #{tpu_custom_call.1} parent=5 // pred_region
        // Predicated region
        $region37: #{tpu_custom_call.1} parent=35 // pred_check
          %p305 = pneg %p52
        $region38: #{tpu_custom_call.1} parent=35 // pred_check_branch
          %307 = sbr.rel (%p305) target = $region40
        $region39: #{tpu_custom_call.1} parent=35 // pred_region
          %p308 = scmp.lt.s32.totalorder %s25, 1
          %s309 = scalar_select %p308, %s25, 1
          %p310 = scmp.lt.s32.totalorder %s26, 0
          %s311 = scalar_select %p310, %s26, 0
          %s312 = sadd.s32 %s311, %s309
          %s313 = smul.addr %s312, 4
          %s314 = scalar_lea.vmem %s0, %s313
        $region40: #{tpu_custom_call.1} parent=35 // pred_fallthru
          _
        // Predicated region
        $region41: #{tpu_custom_call.1} parent=35 // pred_check
          %p315 = pneg %p78
        $region42: #{tpu_custom_call.1} parent=35 // pred_check_branch
          %317 = sbr.rel (%p315) target = $region44
        $region43: #{tpu_custom_call.1} parent=35 // pred_region
          %p318 = scmp.lt.s32.totalorder %s25, 1
          %s319 = scalar_select %p318, %s25, 1
          %s320 = smul.addr %s319, 4
          %s321 = scalar_lea.vmem %s1, %s320
        $region44: #{tpu_custom_call.1} parent=35 // pred_fallthru
          _
        // Predicated region
        $region45: #{tpu_custom_call.1} parent=35 // pred_check
          %p322 = pneg %p104
        $region46: #{tpu_custom_call.1} parent=35 // pred_check_branch
          %324 = sbr.rel (%p322) target = $region48
        $region47: #{tpu_custom_call.1} parent=35 // pred_region
          %p325 = scmp.lt.s32.totalorder %s25, 1
          %s326 = scalar_select %p325, %s25, 1
          %s327 = smul.addr %s326, 2
          %s328 = scalar_lea.vmem %s2, %s327
        $region48: #{tpu_custom_call.1} parent=35 // pred_fallthru
          _
        // Predicated region
        $region49: #{tpu_custom_call.1} parent=35 // pred_check
          %p329 = pneg %p132
        $region50: #{tpu_custom_call.1} parent=35 // pred_check_branch
          %331 = sbr.rel (%p329) target = $region52
        $region51: #{tpu_custom_call.1} parent=35 // pred_region
          %p332 = scmp.lt.s32.totalorder %s25, 1
          %s333 = scalar_select %p332, %s25, 1
          %p334 = scmp.lt.s32.totalorder %s26, 0
          %s335 = scalar_select %p334, %s26, 0
          %s336 = sadd.s32 %s335, %s333
          %s337 = smul.addr %s336, 2
          %s338 = scalar_lea.vmem %s3, %s337
        $region52: #{tpu_custom_call.1} parent=35 // pred_fallthru
          _
      $region36: #{tpu_custom_call.1} parent=5 // pred_fallthru
        _
      %p339 = scmp.le.s32.totalorder 1, %s18
      %p340 = scmp.lt.s32.totalorder %s18, 3
      %p341 = pnand %p339, %p340
      %p342 = pneg %p341
      // Predicated region
      $region53: #{tpu_custom_call.1} parent=5 // pred_check
        _
      $region54: #{tpu_custom_call.1} parent=5 // pred_check_branch
        %344 = sbr.rel (%p341) target = $region56
      $region55: #{tpu_custom_call.1} parent=5 // pred_region
        %s345 = ssub.s32 %s18, 1
        %p346 = scmp.lt.s32.totalorder %s27, 1
        %s347 = scalar_select %p346, %s27, 1
        %p348 = scmp.lt.s32.totalorder %s28, 0
        %s349 = scalar_select %p348, %s28, 0
        %s350 = sadd.s32 %s349, %s347
        %s351 = smul.addr %s350, 4
        %s352 = scalar_lea.vmem %s0, %s351
        %p353 = pneg %p58
        %p354 = pneg %p55
        %p355 = scmp.lt.s32.totalorder %s27, 1
        %s356 = scalar_select %p355, %s27, 1
        %s357 = smul.addr %s356, 4
        %s358 = scalar_lea.vmem %s1, %s357
        %p359 = pneg %p84
        %p360 = pneg %p81
        %p361 = scmp.lt.s32.totalorder %s27, 1
        %s362 = scalar_select %p361, %s27, 1
        %s363 = smul.addr %s362, 2
        %s364 = scalar_lea.vmem %s2, %s363
        %p365 = pneg %p110
        %p366 = pneg %p107
        %p367 = scmp.lt.s32.totalorder %s27, 1
        %s368 = scalar_select %p367, %s27, 1
        %p369 = scmp.lt.s32.totalorder %s28, 0
        %s370 = scalar_select %p369, %s28, 0
        %s371 = sadd.s32 %s370, %s368
        %s372 = smul.addr %s371, 2
        %s373 = scalar_lea.vmem %s3, %s372
        %p374 = pneg %p138
        %p375 = pneg %p135
        %p376 = pneg %p159
        %p377 = pneg %p156
        %p378 = pneg %p180
        %p379 = pneg %p177
        %p380 = pneg %p201
        %p381 = pneg %p198
        %p382 = pneg %p222
        %p383 = pneg %p219
        %p384 = pneg %p243
        %p385 = pneg %p240
        %p386 = pneg %p271
        %p387 = pneg %p268
        %s388 = sand.u32 %s258, 1
        %s389 = scalar_lea.sflag [#allocation3], %s388
        %s390 = sand.u32 %s258, 1
        %s391 = smul.addr %s390, 16
        %s392 = scalar_lea.vmem [#allocation2], %s391
        %p393 = scmp.lt.s32.totalorder %s27, 1
        %s394 = scalar_select %p393, %s27, 1
        %p395 = scmp.lt.s32.totalorder %s28, 0
        %s396 = scalar_select %p395, %s28, 0
        %s397 = sadd.s32 %s396, %s394
        %s398 = smul.addr %s397, 4
        %s399 = scalar_lea.vmem %s0, %s398
        %p400 = scmp.lt.s32.totalorder %s27, 1
        %s401 = scalar_select %p400, %s27, 1
        %s402 = smul.addr %s401, 4
        %s403 = scalar_lea.vmem %s1, %s402
        %p404 = scmp.lt.s32.totalorder %s27, 1
        %s405 = scalar_select %p404, %s27, 1
        %s406 = smul.addr %s405, 2
        %s407 = scalar_lea.vmem %s2, %s406
        %p408 = scmp.lt.s32.totalorder %s27, 1
        %s409 = scalar_select %p408, %s27, 1
        %p410 = scmp.lt.s32.totalorder %s28, 0
        %s411 = scalar_select %p410, %s28, 0
        %s412 = sadd.s32 %s411, %s409
        %s413 = smul.addr %s412, 2
        %s414 = scalar_lea.vmem %s3, %s413
        %v416 = vld [vmem:[%s399] sm:$0x7]
        %v417 = vld [vmem:[%s403] sm:$0x7]
        %v418 = vld [vmem:[%s407] sm:$0x3]
        %v419 = vld [vmem:[%s414] sm:$0x3]
        %420 = vxpose.xlu0.b32.start [1/16] %v416, 128
        %421 = vxpose.xlu0.b32.cont [2/16] 0.0, 128
        %422 = vxpose.xlu0.b32.cont [3/16] 0.0, 128
        %423 = vxpose.xlu0.b32.cont [4/16] 0.0, 128
        %424 = vxpose.xlu0.b32.cont [5/16] 0.0, 128
        %425 = vxpose.xlu0.b32.cont [6/16] 0.0, 128
        %426 = vxpose.xlu0.b32.cont [7/16] 0.0, 128
        %427 = vxpose.xlu0.b32.cont [8/16] 0.0, 128
        %428 = vxpose.xlu0.b32.cont [9/16] 0.0, 128
        %429 = vxpose.xlu0.b32.cont [10/16] 0.0, 128
        %430 = vxpose.xlu0.b32.cont [11/16] 0.0, 128
        %431 = vxpose.xlu0.b32.cont [12/16] 0.0, 128
        %432 = vxpose.xlu0.b32.cont [13/16] 0.0, 128
        %433 = vxpose.xlu0.b32.cont [14/16] 0.0, 128
        %434 = vxpose.xlu0.b32.cont [15/16] 0.0, 128
        %435 = vxpose.xlu0.b32.end [16/16] 0.0, 128
        %v436 = vpop.trf.xlu0
        %v437 = vpop.trf.xlu0
        %v438 = vpop.trf.xlu0
        %v439 = vpop.trf.xlu0
        %v440 = vpop.trf.xlu0
        %v441 = vpop.trf.xlu0
        %v442 = vpop.trf.xlu0
        %v443 = vpop.trf.xlu0
        %v444 = vpop.trf.xlu0
        %v445 = vpop.trf.xlu0
        %v446 = vpop.trf.xlu0
        %v447 = vpop.trf.xlu0
        %v448 = vpop.trf.xlu0
        %v449 = vpop.trf.xlu0
        %v450 = vpop.trf.xlu0
        %v451 = vpop.trf.xlu0
        %v452 = vmul.f32 %v436, %v436
        %v453 = vmul.f32 %v437, %v437
        %vm454 = vcmask 23552
        %v455 = vsel %vm454, %v452, 0.0
        %456 = vadd.xlane.f32.xlu0 %v455
        %v457 = vpop.xlane.xlu0 %456
        %v458 = vsel %vm454, %v453, 0.0
        %459 = vadd.xlane.f32.xlu0 %v458
        %v460 = vpop.xlane.xlu0 %459
        %v461 = vmul.f32 %v417, %v417
        %vm462 = vcmask 59392
        %v463 = vsel %vm462, %v461, 0.0
        %v464 = vrot.slane %v463, 4
        %v465 = vadd.f32 %v463, %v464
        %v466 = vrot.slane %v465, 2
        %v467 = vadd.f32 %v465, %v466
        %v468 = vrot.slane %v467, 1
        %v469 = vadd.f32 %v467, %v468
        %v471 = vsel %vm454, %v436, 0
        %v474 = vsel %vm454, %v437, 0
        %vm476 = vcmask 1042432
        %v478 = vsel %vm476, %v417, 0
        %480 = vmatprep.subr.mxu0 0.0
        %481 = vmatpush1.msra.mxu0 %v478
        %482 = vmatprep.subr.mxu0 0.0
        %483 = vmatpush1.msra.mxu0 0.0
        %484 = vmatprep.subr.mxu0 0.0
        %485 = vmatpush1.msra.mxu0 0.0
        %486 = vmatprep.subr.mxu0 0.0
        %487 = vmatpush1.msra.mxu0 0.0
        %488 = vmatprep.subr.mxu0 0.0
        %489 = vmatpush1.msra.mxu0 0.0
        %490 = vmatprep.subr.mxu0 0.0
        %491 = vmatpush1.msra.mxu0 0.0
        %492 = vmatprep.subr.mxu0 0.0
        %493 = vmatpush1.msra.mxu0 0.0
        %494 = vmatprep.subr.mxu0 0.0
        %495 = vmatpush1.msra.mxu0 0.0
        %496 = vmatprep.subr.mxu0 0.0
        %497 = vmatpush1.msra.mxu0 0.0
        %498 = vmatprep.subr.mxu0 0.0
        %499 = vmatpush1.msra.mxu0 0.0
        %500 = vmatprep.subr.mxu0 0.0
        %501 = vmatpush1.msra.mxu0 0.0
        %502 = vmatprep.subr.mxu0 0.0
        %503 = vmatpush1.msra.mxu0 0.0
        %504 = vmatprep.subr.mxu0 0.0
        %505 = vmatpush1.msra.mxu0 0.0
        %506 = vmatprep.subr.mxu0 0.0
        %507 = vmatpush1.msra.mxu0 0.0
        %508 = vmatprep.subr.mxu0 0.0
        %509 = vmatpush1.msra.mxu0 0.0
        %510 = vmatprep.subr.mxu0 0.0
        %511 = vmatpush1.msra.mxu0 0.0
        %512 = vmatprep.subr.mxu0 0.0
        %513 = vmatpush1.msra.mxu0 0.0
        %514 = vmatprep.subr.mxu0 0.0
        %515 = vmatpush1.msra.mxu0 0.0
        %516 = vmatprep.subr.mxu0 0.0
        %517 = vmatpush1.msra.mxu0 0.0
        %518 = vmatprep.subr.mxu0 0.0
        %519 = vmatpush1.msra.mxu0 0.0
        %520 = vmatprep.subr.mxu0 0.0
        %521 = vmatpush1.msra.mxu0 0.0
        %522 = vmatprep.subr.mxu0 0.0
        %523 = vmatpush1.msra.mxu0 0.0
        %524 = vmatprep.subr.mxu0 0.0
        %525 = vmatpush1.msra.mxu0 0.0
        %526 = vmatprep.subr.mxu0 0.0
        %527 = vmatpush1.msra.mxu0 0.0
        %528 = vmatprep.subr.mxu0 0.0
        %529 = vmatpush1.msra.mxu0 0.0
        %530 = vmatprep.subr.mxu0 0.0
        %531 = vmatpush1.msra.mxu0 0.0
        %532 = vmatprep.subr.mxu0 0.0
        %533 = vmatpush1.msra.mxu0 0.0
        %534 = vmatprep.subr.mxu0 0.0
        %535 = vmatpush1.msra.mxu0 0.0
        %536 = vmatprep.subr.mxu0 0.0
        %537 = vmatpush1.msra.mxu0 0.0
        %538 = vmatprep.subr.mxu0 0.0
        %539 = vmatpush1.msra.mxu0 0.0
        %540 = vmatprep.subr.mxu0 0.0
        %541 = vmatpush1.msra.mxu0 0.0
        %542 = vmatprep.subr.mxu0 0.0
        %543 = vmatpush1.msra.mxu0 0.0
        %544 = vmatprep.mubr.f32.mxu0 0.0
        %545 = vmatmul.mubr.f32.gmra.mrb[0].mxu0 %v471
        %v546 = vpop.f32.mrb[0].mxu0
        %v547 = vadd.f32 0.0, %v546
        %v548 = vpop.f32.mrb[0].mxu0
        %549 = vmatprep.mubr.f32.mxu0 0.0
        %550 = vmatmul.mubr.f32.gmra.mrb[0].mxu0 %v474
        %v551 = vpop.f32.mrb[0].mxu0
        %v552 = vadd.f32 0.0, %v551
        %v553 = vpop.f32.mrb[0].mxu0
        %554 = vdwg.mxu0
        %v555 = vmul.f32 %v547, 2.0
        %v556 = vmul.f32 %v552, 2.0
        %v557 = vsub.f32 %v469, %v555
        %v558 = vsub.f32 %v469, %v556
        %v559 = vlaneseq
        %v560 = vand.u32 %v559, 127
        %vm561 = vcmask 64512
        %v562 = vsel %vm561, %v557, inf
        %563 = vmin.xlane.f32.xlu0 %v562
        %v564 = vpop.xlane.xlu0 %563
        %v565 = vsel %vm561, %v558, inf
        %566 = vmin.xlane.f32.xlu0 %v565
        %v567 = vpop.xlane.xlu0 %566
        %vm568 = vcmp.eq.f32.partialorder %v557, %v564
        %vm569 = vcmp.eq.f32.partialorder %v558, %v567
        %v570 = vsel %vm568, %v560, 8
        %v571 = vsel %vm569, %v560, 8
        %v572 = vsel %vm561, %v570, 2147483647
        %v573 = vand.u32 %v572, 65535
        %v574 = vshra.s32 %v572, 16
        %v575 = vcvt.s32.f32 %v573
        %v576 = vcvt.s32.f32 %v574
        %577 = vmin.xlane.f32.xlu0 %v576
        %v578 = vpop.xlane.xlu0 %577
        %vm579 = vcmp.eq.f32.partialorder %v576, %v578
        %v580 = vsel %vm579, %v575, inf
        %581 = vmin.xlane.f32.xlu0 %v580
        %v582 = vpop.xlane.xlu0 %581
        %v583 = vcvt.f32.s32 %v582
        %v584 = vcvt.f32.s32 %v578
        %v585 = vshll.u32 %v584, 16
        %v586 = vadd.s32 %v585, %v583
        %v587 = vsel %vm561, %v571, 2147483647
        %v588 = vand.u32 %v587, 65535
        %v589 = vshra.s32 %v587, 16
        %v590 = vcvt.s32.f32 %v588
        %v591 = vcvt.s32.f32 %v589
        %592 = vmin.xlane.f32.xlu0 %v591
        %v593 = vpop.xlane.xlu0 %592
        %vm594 = vcmp.eq.f32.partialorder %v591, %v593
        %v595 = vsel %vm594, %v590, inf
        %596 = vmin.xlane.f32.xlu0 %v595
        %v597 = vpop.xlane.xlu0 %596
        %v598 = vcvt.f32.s32 %v597
        %v599 = vcvt.f32.s32 %v593
        %v600 = vshll.u32 %v599, 16
        %v601 = vadd.s32 %v600, %v598
        %vm602 = vcmp.eq.s32.totalorder %v560, %v586
        %vm603 = vcmp.eq.s32.totalorder %v560, %v601
        %v604 = vadd.f32 %v564, %v457
        %v605 = vadd.f32 %v567, %v460
        %v606 = vmax.f32 %v604, 0.0
        %v607 = vmax.f32 %v605, 0.0
        %v608 = vadd.f32 %v606, 1e-08
        %v609 = vadd.f32 %v607, 1e-08
        %v610 = vrcp.pop %v608
        %v611 = vmul.f32 1.0, %v610
        %v612 = vrcp.pop %v609
        %v613 = vmul.f32 1.0, %v612
        %v614 = vsel %vm602, %v611, 0.0
        %v615 = vsel %vm603, %v613, 0.0
        %v616 = vadd.f32 %v614, 0.0
        %v617 = vadd.f32 %v615, 0.0
        %v618 = vadd.f32 %v611, 0.0
        %v619 = vadd.f32 %v613, 0.0
        %v620 = vsel %vm602, inf, %v557
        %v621 = vsel %vm603, inf, %v558
        %v622 = vsel %vm561, %v620, inf
        %623 = vmin.xlane.f32.xlu0 %v622
        %v624 = vpop.xlane.xlu0 %623
        %v625 = vsel %vm561, %v621, inf
        %626 = vmin.xlane.f32.xlu0 %v625
        %v627 = vpop.xlane.xlu0 %626
        %vm628 = vcmp.eq.f32.partialorder %v620, %v624
        %vm629 = vcmp.eq.f32.partialorder %v621, %v627
        %v630 = vsel %vm628, %v560, 8
        %v631 = vsel %vm629, %v560, 8
        %v632 = vsel %vm561, %v630, 2147483647
        %v633 = vand.u32 %v632, 65535
        %v634 = vshra.s32 %v632, 16
        %v635 = vcvt.s32.f32 %v633
        %v636 = vcvt.s32.f32 %v634
        %637 = vmin.xlane.f32.xlu0 %v636
        %v638 = vpop.xlane.xlu0 %637
        %vm639 = vcmp.eq.f32.partialorder %v636, %v638
        %v640 = vsel %vm639, %v635, inf
        %641 = vmin.xlane.f32.xlu0 %v640
        %v642 = vpop.xlane.xlu0 %641
        %v643 = vcvt.f32.s32 %v642
        %v644 = vcvt.f32.s32 %v638
        %v645 = vshll.u32 %v644, 16
        %v646 = vadd.s32 %v645, %v643
        %v647 = vsel %vm561, %v631, 2147483647
        %v648 = vand.u32 %v647, 65535
        %v649 = vshra.s32 %v647, 16
        %v650 = vcvt.s32.f32 %v648
        %v651 = vcvt.s32.f32 %v649
        %652 = vmin.xlane.f32.xlu0 %v651
        %v653 = vpop.xlane.xlu0 %652
        %vm654 = vcmp.eq.f32.partialorder %v651, %v653
        %v655 = vsel %vm654, %v650, inf
        %656 = vmin.xlane.f32.xlu0 %v655
        %v657 = vpop.xlane.xlu0 %656
        %v658 = vcvt.f32.s32 %v657
        %v659 = vcvt.f32.s32 %v653
        %v660 = vshll.u32 %v659, 16
        %v661 = vadd.s32 %v660, %v658
        %vm662 = vcmp.eq.s32.totalorder %v560, %v646
        %vm663 = vcmp.eq.s32.totalorder %v560, %v661
        %v664 = vadd.f32 %v624, %v457
        %v665 = vadd.f32 %v627, %v460
        %v666 = vmax.f32 %v664, 0.0
        %v667 = vmax.f32 %v665, 0.0
        %v668 = vadd.f32 %v666, 1e-08
        %v669 = vadd.f32 %v667, 1e-08
        %v670 = vrcp.pop %v668
        %v671 = vmul.f32 1.0, %v670
        %v672 = vrcp.pop %v669
        %v673 = vmul.f32 1.0, %v672
        %v674 = vsel %vm662, %v671, 0.0
        %v675 = vsel %vm663, %v673, 0.0
        %v676 = vadd.f32 %v616, %v674
        %v677 = vadd.f32 %v617, %v675
        %v678 = vadd.f32 %v618, %v671
        %v679 = vadd.f32 %v619, %v673
        %v680 = vsel %vm662, inf, %v620
        %v681 = vsel %vm663, inf, %v621
        %v682 = vsel %vm561, %v680, inf
        %683 = vmin.xlane.f32.xlu0 %v682
        %v684 = vpop.xlane.xlu0 %683
        %v685 = vsel %vm561, %v681, inf
        %686 = vmin.xlane.f32.xlu0 %v685
        %v687 = vpop.xlane.xlu0 %686
        %vm688 = vcmp.eq.f32.partialorder %v680, %v684
        %vm689 = vcmp.eq.f32.partialorder %v681, %v687
        %v690 = vsel %vm688, %v560, 8
        %v691 = vsel %vm689, %v560, 8
        %v692 = vsel %vm561, %v690, 2147483647
        %v693 = vand.u32 %v692, 65535
        %v694 = vshra.s32 %v692, 16
        %v695 = vcvt.s32.f32 %v693
        %v696 = vcvt.s32.f32 %v694
        %697 = vmin.xlane.f32.xlu0 %v696
        %v698 = vpop.xlane.xlu0 %697
        %vm699 = vcmp.eq.f32.partialorder %v696, %v698
        %v700 = vsel %vm699, %v695, inf
        %701 = vmin.xlane.f32.xlu0 %v700
        %v702 = vpop.xlane.xlu0 %701
        %v703 = vcvt.f32.s32 %v702
        %v704 = vcvt.f32.s32 %v698
        %v705 = vshll.u32 %v704, 16
        %v706 = vadd.s32 %v705, %v703
        %v707 = vsel %vm561, %v691, 2147483647
        %v708 = vand.u32 %v707, 65535
        %v709 = vshra.s32 %v707, 16
        %v710 = vcvt.s32.f32 %v708
        %v711 = vcvt.s32.f32 %v709
        %712 = vmin.xlane.f32.xlu0 %v711
        %v713 = vpop.xlane.xlu0 %712
        %vm714 = vcmp.eq.f32.partialorder %v711, %v713
        %v715 = vsel %vm714, %v710, inf
        %716 = vmin.xlane.f32.xlu0 %v715
        %v717 = vpop.xlane.xlu0 %716
        %v718 = vcvt.f32.s32 %v717
        %v719 = vcvt.f32.s32 %v713
        %v720 = vshll.u32 %v719, 16
        %v721 = vadd.s32 %v720, %v718
        %vm722 = vcmp.eq.s32.totalorder %v560, %v706
        %vm723 = vcmp.eq.s32.totalorder %v560, %v721
        %v724 = vadd.f32 %v684, %v457
        %v725 = vadd.f32 %v687, %v460
        %v726 = vmax.f32 %v724, 0.0
        %v727 = vmax.f32 %v725, 0.0
        %v728 = vadd.f32 %v726, 1e-08
        %v729 = vadd.f32 %v727, 1e-08
        %v730 = vrcp.pop %v728
        %v731 = vmul.f32 1.0, %v730
        %v732 = vrcp.pop %v729
        %v733 = vmul.f32 1.0, %v732
        %v734 = vsel %vm722, %v731, 0.0
        %v735 = vsel %vm723, %v733, 0.0
        %v736 = vadd.f32 %v676, %v734
        %v737 = vadd.f32 %v677, %v735
        %v738 = vadd.f32 %v678, %v731
        %v739 = vadd.f32 %v679, %v733
        %v740 = vrcp.pop %v738
        %v741 = vmul.f32 1.0, %v740
        %v742 = vrcp.pop %v739
        %v743 = vmul.f32 1.0, %v742
        %v744 = vmul.f32 %v736, %v741
        %v745 = vmul.f32 %v737, %v743
        %v746 = vpack.c.bf16 %v745, %v744
        %v748 = vsel %vm561, %v418, 0
        %v751 = vsel %vm561, %v746, 0
        %753 = vmatprep.subr.bf16.mxu0 0
        %754 = vmatpush1.bf16.xpose.msra.mxu0 %v751
        %755 = vmatprep.subr.bf16.mxu0 0
        %756 = vmatpush1.bf16.xpose.msra.mxu0 0
        %757 = vmatprep.subr.bf16.mxu0 0
        %758 = vmatpush1.bf16.xpose.msra.mxu0 0
        %759 = vmatprep.subr.bf16.mxu0 0
        %760 = vmatpush1.bf16.xpose.msra.mxu0 0
        %761 = vmatprep.subr.bf16.mxu0 0
        %762 = vmatpush1.bf16.xpose.msra.mxu0 0
        %763 = vmatprep.subr.bf16.mxu0 0
        %764 = vmatpush1.bf16.xpose.msra.mxu0 0
        %765 = vmatprep.subr.bf16.mxu0 0
        %766 = vmatpush1.bf16.xpose.msra.mxu0 0
        %767 = vmatprep.subr.bf16.mxu0 0
        %768 = vmatpush1.bf16.xpose.msra.mxu0 0
        %769 = vmatprep.subr.bf16.mxu0 0
        %770 = vmatpush1.bf16.xpose.msra.mxu0 0
        %771 = vmatprep.subr.bf16.mxu0 0
        %772 = vmatpush1.bf16.xpose.msra.mxu0 0
        %773 = vmatprep.subr.bf16.mxu0 0
        %774 = vmatpush1.bf16.xpose.msra.mxu0 0
        %775 = vmatprep.subr.bf16.mxu0 0
        %776 = vmatpush1.bf16.xpose.msra.mxu0 0
        %777 = vmatprep.subr.bf16.mxu0 0
        %778 = vmatpush1.bf16.xpose.msra.mxu0 0
        %779 = vmatprep.subr.bf16.mxu0 0
        %780 = vmatpush1.bf16.xpose.msra.mxu0 0
        %781 = vmatprep.subr.bf16.mxu0 0
        %782 = vmatpush1.bf16.xpose.msra.mxu0 0
        %783 = vmatprep.subr.bf16.mxu0 0
        %784 = vmatpush1.bf16.xpose.msra.mxu0 0
        %785 = vmatprep.mubr.bf16.mxu0 0
        %786 = vmatmul.mubr.bf16.gmra.mrb[0].mxu0 %v748
        %v787 = vpop.f32.mrb[0].mxu0
        %v788 = vadd.f32 0.0, %v787
        %v789 = vpop.f32.mrb[0].mxu0
        %v790 = vpop.f32.mrb[0].mxu0
        %v791 = vpop.f32.mrb[0].mxu0
        %792 = vdwg.mxu0
        %v793 = vpack.c.bf16 %v788, %v788
        %v794 = vld [vmem:[%s4] sm:$0xf]
        %v795 = vld [vmem:[%s4 + $0x4] sm:$0xf]
        %v796 = vld [vmem:[%s4 + $0x8] sm:$0xf]
        %v797 = vld [vmem:[%s4 + $0xc] sm:$0xf]
        %v798 = vld [vmem:[%s5] sm:$0xf]
        %v799 = vld [vmem:[%s5 + $0x4] sm:$0xf]
        %v800 = vld [vmem:[%s5 + $0x8] sm:$0xf]
        %v801 = vld [vmem:[%s5 + $0xc] sm:$0xf]
        %v802 = vld [vmem:[%s6] sm:$0xff]
        %v803 = vld [vmem:[%s6 + $0x8] sm:$0xff]
        %v804 = vld [vmem:[%s6 + $0x10] sm:$0xff]
        %v805 = vld [vmem:[%s6 + $0x18] sm:$0xff]
        %v810 = vunpack.c.l.b16 %v798
        %v811 = vunpack.c.l.b16 %v799
        %v812 = vunpack.c.l.b16 %v800
        %v813 = vunpack.c.l.b16 %v801
        %v814 = vpack.c.b16 %v811, %v810
        %v815 = vpack.c.b16 %v813, %v812
        %vm816 = vcmask 31744
        %v818 = vsel %vm816, %v814, 0
        %v821 = vsel %vm816, %v815, 0
        %vm823 = vcmask 1041408
        %v825 = vsel %vm823, %v793, 0
        %827 = vmatprep.subr.bf16.mxu0 0
        %828 = vmatpush1.bf16.msra.mxu0 %v825
        %829 = vmatprep.subr.bf16.mxu0 0
        %830 = vmatpush1.bf16.msra.mxu0 0
        %831 = vmatprep.subr.bf16.mxu0 0
        %832 = vmatpush1.bf16.msra.mxu0 0
        %833 = vmatprep.subr.bf16.mxu0 0
        %834 = vmatpush1.bf16.msra.mxu0 0
        %835 = vmatprep.subr.bf16.mxu0 0
        %836 = vmatpush1.bf16.msra.mxu0 0
        %837 = vmatprep.subr.bf16.mxu0 0
        %838 = vmatpush1.bf16.msra.mxu0 0
        %839 = vmatprep.subr.bf16.mxu0 0
        %840 = vmatpush1.bf16.msra.mxu0 0
        %841 = vmatprep.subr.bf16.mxu0 0
        %842 = vmatpush1.bf16.msra.mxu0 0
        %843 = vmatprep.subr.bf16.mxu0 0
        %844 = vmatpush1.bf16.msra.mxu0 0
        %845 = vmatprep.subr.bf16.mxu0 0
        %846 = vmatpush1.bf16.msra.mxu0 0
        %847 = vmatprep.subr.bf16.mxu0 0
        %848 = vmatpush1.bf16.msra.mxu0 0
        %849 = vmatprep.subr.bf16.mxu0 0
        %850 = vmatpush1.bf16.msra.mxu0 0
        %851 = vmatprep.subr.bf16.mxu0 0
        %852 = vmatpush1.bf16.msra.mxu0 0
        %853 = vmatprep.subr.bf16.mxu0 0
        %854 = vmatpush1.bf16.msra.mxu0 0
        %855 = vmatprep.subr.bf16.mxu0 0
        %856 = vmatpush1.bf16.msra.mxu0 0
        %857 = vmatprep.subr.bf16.mxu0 0
        %858 = vmatpush1.bf16.msra.mxu0 0
        %859 = vmatprep.mubr.bf16.mxu0 0
        %860 = vmatmul.mubr.bf16.gmra.mrb[0].mxu0 %v818
        %v861 = vpop.f32.mrb[0].mxu0
        %v862 = vadd.f32 0.0, %v861
        %v863 = vpop.f32.mrb[0].mxu0
        %v864 = vpop.f32.mrb[0].mxu0
        %v865 = vadd.f32 0.0, %v864
        %v866 = vpop.f32.mrb[0].mxu0
        %867 = vmatprep.mubr.bf16.mxu0 0
        %868 = vmatmul.mubr.bf16.gmra.mrb[0].mxu0 %v821
        %v869 = vpop.f32.mrb[0].mxu0
        %v870 = vadd.f32 0.0, %v869
        %v871 = vpop.f32.mrb[0].mxu0
        %v872 = vpop.f32.mrb[0].mxu0
        %v873 = vadd.f32 0.0, %v872
        %v874 = vpop.f32.mrb[0].mxu0
        %875 = vdwg.mxu0
        %v880 = vunpack.c.l.b16 %v794
        %v881 = vunpack.c.l.b16 %v795
        %v882 = vunpack.c.l.b16 %v796
        %v883 = vunpack.c.l.b16 %v797
        %v884 = vpack.c.b16 %v881, %v880
        %v885 = vpack.c.b16 %v883, %v882
        %v887 = vsel %vm816, %v884, 0
        %v890 = vsel %vm816, %v885, 0
        %v893 = vsel %vm823, %v419, 0
        %895 = vmatprep.subr.bf16.mxu0 0
        %896 = vmatpush1.bf16.msra.mxu0 %v893
        %897 = vmatprep.subr.bf16.mxu0 0
        %898 = vmatpush1.bf16.msra.mxu0 0
        %899 = vmatprep.subr.bf16.mxu0 0
        %900 = vmatpush1.bf16.msra.mxu0 0
        %901 = vmatprep.subr.bf16.mxu0 0
        %902 = vmatpush1.bf16.msra.mxu0 0
        %903 = vmatprep.subr.bf16.mxu0 0
        %904 = vmatpush1.bf16.msra.mxu0 0
        %905 = vmatprep.subr.bf16.mxu0 0
        %906 = vmatpush1.bf16.msra.mxu0 0
        %907 = vmatprep.subr.bf16.mxu0 0
        %908 = vmatpush1.bf16.msra.mxu0 0
        %909 = vmatprep.subr.bf16.mxu0 0
        %910 = vmatpush1.bf16.msra.mxu0 0
        %911 = vmatprep.subr.bf16.mxu0 0
        %912 = vmatpush1.bf16.msra.mxu0 0
        %913 = vmatprep.subr.bf16.mxu0 0
        %914 = vmatpush1.bf16.msra.mxu0 0
        %915 = vmatprep.subr.bf16.mxu0 0
        %916 = vmatpush1.bf16.msra.mxu0 0
        %917 = vmatprep.subr.bf16.mxu0 0
        %918 = vmatpush1.bf16.msra.mxu0 0
        %919 = vmatprep.subr.bf16.mxu0 0
        %920 = vmatpush1.bf16.msra.mxu0 0
        %921 = vmatprep.subr.bf16.mxu0 0
        %922 = vmatpush1.bf16.msra.mxu0 0
        %923 = vmatprep.subr.bf16.mxu0 0
        %924 = vmatpush1.bf16.msra.mxu0 0
        %925 = vmatprep.subr.bf16.mxu0 0
        %926 = vmatpush1.bf16.msra.mxu0 0
        %927 = vmatprep.mubr.bf16.mxu0 0
        %928 = vmatmul.mubr.bf16.gmra.mrb[0].mxu0 %v887
        %v929 = vpop.f32.mrb[0].mxu0
        %v930 = vadd.f32 %v862, %v929
        %v931 = vpop.f32.mrb[0].mxu0
        %v932 = vpop.f32.mrb[0].mxu0
        %v933 = vadd.f32 %v865, %v932
        %v934 = vpop.f32.mrb[0].mxu0
        %935 = vmatprep.mubr.bf16.mxu0 0
        %936 = vmatmul.mubr.bf16.gmra.mrb[0].mxu0 %v890
        %v937 = vpop.f32.mrb[0].mxu0
        %v938 = vadd.f32 %v870, %v937
        %v939 = vpop.f32.mrb[0].mxu0
        %v940 = vpop.f32.mrb[0].mxu0
        %v941 = vadd.f32 %v873, %v940
        %v942 = vpop.f32.mrb[0].mxu0
        %943 = vdwg.mxu0
        %945 = vset.pattern.permute.xlu0 0
        %946 = vperm.xlu0 %945, %v802
        %v947 = vpop.permute.xlu0 %946
        %950 = vset.pattern.permute.xlu0 0
        %951 = vperm.xlu0 %950, %v803
        %v952 = vpop.permute.xlu0 %951
        %955 = vset.pattern.permute.xlu0 0
        %956 = vperm.xlu0 %955, %v804
        %v957 = vpop.permute.xlu0 %956
        %960 = vset.pattern.permute.xlu0 0
        %961 = vperm.xlu0 %960, %v805
        %v962 = vpop.permute.xlu0 %961
        %v964 = vadd.f32 %v930, %v947
        %v965 = vadd.f32 %v933, %v952
        %v966 = vadd.f32 %v938, %v957
        %v967 = vadd.f32 %v941, %v962
        %v968 = vmax.f32 %v964, 0.0
        %v969 = vmax.f32 %v965, 0.0
        %v970 = vmax.f32 %v966, 0.0
        %v971 = vmax.f32 %v967, 0.0
        %v972 = vld [vmem:[%s7] sm:$0xf]
        %v973 = vld [vmem:[%s7 + $0x4] sm:$0xf]
        %v974 = vld [vmem:[%s8] sm:$0xff]
        %v975 = vld [vmem:[%s8 + $0x8] sm:$0xff]
        %v976 = vpack.c.bf16 %v969, %v968
        %v977 = vpack.c.bf16 %v971, %v970
        %979 = vset.pattern.permute.xlu0 0
        %980 = vperm.xlu0 %979, %v974
        %v981 = vpop.permute.xlu0 %980
        %984 = vset.pattern.permute.xlu0 0
        %985 = vperm.xlu0 %984, %v975
        %v986 = vpop.permute.xlu0 %985
        %v990 = vunpack.c.l.b16 %v972
        %v991 = vunpack.c.l.b16 %v973
        %v992 = vpack.c.b16 %v991, %v990
        %vm993 = vcmask 261120
        %v995 = vsel %vm993, %v992, 0
        %997 = vmatprep.subr.bf16.mxu0 0
        %998 = vmatpush1.bf16.msra.mxu0 %v976
        %999 = vmatprep.subr.bf16.mxu0 0
        %1000 = vmatpush1.bf16.msra.mxu0 %v977
        %1001 = vmatprep.subr.bf16.mxu0 0
        %1002 = vmatpush1.bf16.msra.mxu0 0
        %1003 = vmatprep.subr.bf16.mxu0 0
        %1004 = vmatpush1.bf16.msra.mxu0 0
        %1005 = vmatprep.subr.bf16.mxu0 0
        %1006 = vmatpush1.bf16.msra.mxu0 0
        %1007 = vmatprep.subr.bf16.mxu0 0
        %1008 = vmatpush1.bf16.msra.mxu0 0
        %1009 = vmatprep.subr.bf16.mxu0 0
        %1010 = vmatpush1.bf16.msra.mxu0 0
        %1011 = vmatprep.subr.bf16.mxu0 0
        %1012 = vmatpush1.bf16.msra.mxu0 0
        %1013 = vmatprep.subr.bf16.mxu0 0
        %1014 = vmatpush1.bf16.msra.mxu0 0
        %1015 = vmatprep.subr.bf16.mxu0 0
        %1016 = vmatpush1.bf16.msra.mxu0 0
        %1017 = vmatprep.subr.bf16.mxu0 0
        %1018 = vmatpush1.bf16.msra.mxu0 0
        %1019 = vmatprep.subr.bf16.mxu0 0
        %1020 = vmatpush1.bf16.msra.mxu0 0
        %1021 = vmatprep.subr.bf16.mxu0 0
        %1022 = vmatpush1.bf16.msra.mxu0 0
        %1023 = vmatprep.subr.bf16.mxu0 0
        %1024 = vmatpush1.bf16.msra.mxu0 0
        %1025 = vmatprep.subr.bf16.mxu0 0
        %1026 = vmatpush1.bf16.msra.mxu0 0
        %1027 = vmatprep.subr.bf16.mxu0 0
        %1028 = vmatpush1.bf16.msra.mxu0 0
        %1029 = vmatprep.mubr.bf16.mxu0 0
        %1030 = vmatmul.mubr.bf16.gmra.mrb[0].mxu0 %v995
        %v1031 = vpop.f32.mrb[0].mxu0
        %v1032 = vadd.f32 %v981, %v1031
        %v1033 = vpop.f32.mrb[0].mxu0
        %v1034 = vpop.f32.mrb[0].mxu0
        %v1035 = vadd.f32 %v986, %v1034
        %v1036 = vpop.f32.mrb[0].mxu0
        %1037 = vdwg.mxu0
        %v1038 = vmax.f32 %v1032, 0.0
        %v1039 = vmax.f32 %v1035, 0.0
        %vm1040 = vcmask 130048
        %1041 = vst.msk [vmem:[%s392] sm:$0xff] %vm1040, %v1038
        %1042 = vst.msk [vmem:[%s392 + $0x8] sm:$0xff] %vm1040, %v1039
        %s1043 = sand.u32 %s258, 1
        %s1044 = scalar_lea.sflag [#allocation3], %s1043
        %s1045 = sand.u32 %s258, 1
        %s1046 = smul.addr %s1045, 16
        %s1047 = scalar_lea.vmem [#allocation2], %s1046
        // Predicated region
        $region57: #{tpu_custom_call.1} parent=55 // pred_check
          %p1048 = pneg %p268
        $region58: #{tpu_custom_call.1} parent=55 // pred_check_branch
          %1050 = sbr.rel (%p1048) target = $region60
        $region59: #{tpu_custom_call.1} parent=55 // pred_region
          %s1052 = ssub.s32 256, 256
          %1053 = vsyncadd %s1044, %s1052
          %s1054 = smul.addr %s27, 2
          %s1055 = sadd.s32 %s28, %s1054
          %s1056 = smul.addr %s1055, 128
          %s1057 = scalar_lea.hbm %s9, %s1056
          %s1058 = sshll.u32 %s1047, 4
          %s1059 = int_to_ptr.vmem [resolvable:$true] %s1058
          %1064 = dma.vmem_to_hbm [thread:$0]  %s1059, 256, %s1057, %s1044, 128, 128, 8
        $region60: #{tpu_custom_call.1} parent=55 // pred_fallthru
          _
      $region56: #{tpu_custom_call.1} parent=5 // pred_fallthru
        _
      %p1065 = scmp.le.s32.totalorder 2, %s18
      // Predicated region
      $region61: #{tpu_custom_call.1} parent=5 // pred_check
        %p1066 = pneg %p1065
      $region62: #{tpu_custom_call.1} parent=5 // pred_check_branch
        %1068 = sbr.rel (%p1066) target = $region64
      $region63: #{tpu_custom_call.1} parent=5 // pred_region
        %s1069 = ssub.s32 %s18, 2
        // Predicated region
        $region65: #{tpu_custom_call.1} parent=63 // pred_check
          %p1070 = pneg %p274
        $region66: #{tpu_custom_call.1} parent=63 // pred_check_branch
          %1072 = sbr.rel (%p1070) target = $region68
        $region67: #{tpu_custom_call.1} parent=63 // pred_region
          %s1073 = sand.u32 %s259, 1
          %s1074 = scalar_lea.sflag [#allocation3], %s1073
          %s1075 = sand.u32 %s259, 1
          %s1076 = smul.addr %s1075, 16
          %s1077 = scalar_lea.vmem [#allocation2], %s1076
          %1078 = dma.done %s1074, 256
        $region68: #{tpu_custom_call.1} parent=63 // pred_fallthru
          _
      $region64: #{tpu_custom_call.1} parent=5 // pred_fallthru
        _
    $region6: #{tpu_custom_call.1} parent=1 // loop_footer
      %s22 = sadd.s32 1, %s18
    $region7: #{tpu_custom_call.1} parent=1 // loop_footer_branch
      %17 = sbr.rel target = $region3
    $region8: #{tpu_custom_call.1} parent=1 // loop_exit
      _
    %1079 = vsyncpa [#allocation3], 1
    %s1080 = scalar_lea.sflag [#allocation3], 1
    %1081 = vsyncpa %s1080, 1

</llo_original>
